<compile_context>
chip_gen: v5e
topology: v5e:2x2
jax: 0.10.0
libtpu: 0.0.40
codegen_flags: <defaults>
</compile_context>

<pallas_src>
import functools
import math

import jax
import jax.numpy as jnp
from jax.experimental import pallas as pl
from jax.experimental.pallas import tpu as pltpu


# ----------------------------------------------------------------------------
# Fused attention kernel (one grid step == one batch element)
# ----------------------------------------------------------------------------
def _attention_kernel(x_ref, wq_ref, wk_ref, wv_ref, wo_ref,
                      bq_ref, bk_ref, bv_ref, bo_ref,
                      out_ref, probs_ref, *, num_heads, scale):
    x = x_ref[0]                                   # (S, H) fp32

    acc = None
    for h in range(num_heads):                     # static, fully unrolled
        # per-head projections: (S, H) @ (H, hd) + (1, hd)
        q = jnp.dot(x, wq_ref[h], preferred_element_type=jnp.float32) + bq_ref[h]
        k = jnp.dot(x, wk_ref[h], preferred_element_type=jnp.float32) + bk_ref[h]
        v = jnp.dot(x, wv_ref[h], preferred_element_type=jnp.float32) + bv_ref[h]

        # scaled dot-product scores: (S, S)
        s = jnp.einsum("qd,kd->qk", q, k,
                       preferred_element_type=jnp.float32) * scale

        # exact softmax (matches torch.nn.Softmax numerics)
        m = jnp.max(s, axis=-1, keepdims=True)
        e = jnp.exp(s - m)
        p = e / jnp.sum(e, axis=-1, keepdims=True)

        probs_ref[0, h] = p.astype(probs_ref.dtype)   # attention weights (vis)

        # context for this head and its slice of the output projection:
        # (S, hd) @ (hd, H) accumulated over heads == concat(ctx) @ Wo.T
        ctx = jnp.dot(p, v, preferred_element_type=jnp.float32)
        part = jnp.dot(ctx, wo_ref[h], preferred_element_type=jnp.float32)
        acc = part if acc is None else acc + part

    out_ref[0] = (acc + bo_ref[...]).astype(out_ref.dtype)


# ----------------------------------------------------------------------------
# Wrapper
# ----------------------------------------------------------------------------
def attention_forward(params, hidden_states, *, num_heads, vis=False):
    """Equivalent of Attention.forward (eval mode).

    params: dict with PyTorch-layout Linear weights:
        wq, wk, wv, wo : (H, H)   (out_features, in_features)
        bq, bk, bv, bo : (H,)
    hidden_states: (B, S, H) float32
    returns (attention_output (B,S,H), weights (B,nh,S,S) or None)
    """
    B, S, H = hidden_states.shape
    head_dim = H // num_heads
    scale = 1.0 / math.sqrt(head_dim)

    # Pre-split weights per head (one-time tiny reshapes, no in-kernel slicing).
    # y = x @ W.T + b  with W:(out,in)  ->  W.T:(in,out); out index = h*hd + d
    def split_proj(w):  # (H_out, H_in) -> (nh, H_in, hd)
        wt = jnp.transpose(w)                               # (H_in, H_out)
        return jnp.transpose(wt.reshape(H, num_heads, head_dim), (1, 0, 2))

    wq = split_proj(params["wq"])
    wk = split_proj(params["wk"])
    wv = split_proj(params["wv"])
    # output projection: ctx(S,H) @ Wo.T ; rows of Wo.T indexed by h*hd + d
    wo = jnp.transpose(params["wo"]).reshape(num_heads, head_dim, H)

    bq = params["bq"].reshape(num_heads, 1, head_dim)
    bk = params["bk"].reshape(num_heads, 1, head_dim)
    bv = params["bv"].reshape(num_heads, 1, head_dim)
    bo = params["bo"].reshape(1, H)

    kernel = functools.partial(_attention_kernel,
                               num_heads=num_heads, scale=scale)

    const3 = lambda b: (0, 0, 0)
    out, probs = pl.pallas_call(
        kernel,
        out_shape=(
            jax.ShapeDtypeStruct((B, S, H), hidden_states.dtype),
            jax.ShapeDtypeStruct((B, num_heads, S, S), jnp.float32),
        ),
        grid=(B,),
        in_specs=[
            pl.BlockSpec((1, S, H), lambda b: (b, 0, 0)),                 # x
            pl.BlockSpec((num_heads, H, head_dim), const3),               # wq
            pl.BlockSpec((num_heads, H, head_dim), const3),               # wk
            pl.BlockSpec((num_heads, H, head_dim), const3),               # wv
            pl.BlockSpec((num_heads, head_dim, H), const3),               # wo
            pl.BlockSpec((num_heads, 1, head_dim), const3),               # bq
            pl.BlockSpec((num_heads, 1, head_dim), const3),               # bk
            pl.BlockSpec((num_heads, 1, head_dim), const3),               # bv
            pl.BlockSpec((1, H), lambda b: (0, 0)),                       # bo
        ],
        out_specs=(
            pl.BlockSpec((1, S, H), lambda b: (b, 0, 0)),
            pl.BlockSpec((1, num_heads, S, S), lambda b: (b, 0, 0, 0)),
        ),
        compiler_params=pltpu.CompilerParams(
            dimension_semantics=("parallel",)),
    )(hidden_states, wq, wk, wv, wo, bq, bk, bv, bo)

    return out, (probs if vis else None)


# ----------------------------------------------------------------------------
# Pure-JAX reference (mirrors the PyTorch module math)
# ----------------------------------------------------------------------------
def attention_reference(params, x, num_heads):
    B, S, H = x.shape
    hd = H // num_heads

    def lin(w, b):
        return x @ jnp.transpose(w) + b

    def split(t):  # (B,S,H) -> (B,nh,S,hd)
        return jnp.transpose(t.reshape(B, S, num_heads, hd), (0, 2, 1, 3))

    qh = split(lin(params["wq"], params["bq"]))
    kh = split(lin(params["wk"], params["bk"]))
    vh = split(lin(params["wv"], params["bv"]))
    s = jnp.einsum("bhqd,bhkd->bhqk", qh, kh) / math.sqrt(hd)
    p = jax.nn.softmax(s, axis=-1)
    ctx = jnp.einsum("bhqk,bhkd->bhqd", p, vh)
    ctx = jnp.transpose(ctx, (0, 2, 1, 3)).reshape(B, S, H)
    out = ctx @ jnp.transpose(params["wo"]) + params["bo"]
    return out, p


# ----------------------------------------------------------------------------
# Deterministic parameter init
# ----------------------------------------------------------------------------
def init_params(key, hidden_size):
    ks = jax.random.split(key, 8)
    s = 1.0 / math.sqrt(hidden_size)

    def lin(kw, kb):
        w = jax.random.normal(kw, (hidden_size, hidden_size), jnp.float32) * s
        b = jax.random.normal(kb, (hidden_size,), jnp.float32) * 0.01
        return w, b

    p = {}
    p["wq"], p["bq"] = lin(ks[0], ks[1])
    p["wk"], p["bk"] = lin(ks[2], ks[3])
    p["wv"], p["bv"] = lin(ks[4], ks[5])
    p["wo"], p["bo"] = lin(ks[6], ks[7])
    return p


# ----------------------------------------------------------------------------
if __name__ == "__main__":
    key = jax.random.PRNGKey(0)
    k_param, k_x = jax.random.split(key)

    B, S, H, NUM_HEADS = 2, 8, 32, 4   # seq = n_patches = 8, hidden = 32
    params = init_params(k_param, H)
    x = jax.random.normal(k_x, (B, S, H), jnp.float32)

    fwd = jax.jit(functools.partial(attention_forward,
                                    num_heads=NUM_HEADS, vis=True))
    out, weights = fwd(params, x)
    jax.block_until_ready(out)
    jax.block_until_ready(weights)

    assert out.shape == (B, S, H), out.shape
    assert weights.shape == (B, NUM_HEADS, S, S), weights.shape

    ref_out, ref_w = attention_reference(params, x, NUM_HEADS)
    assert jnp.allclose(out, ref_out, atol=1e-4, rtol=1e-4), \
        float(jnp.max(jnp.abs(out - ref_out)))
    assert jnp.allclose(weights, ref_w, atol=1e-4, rtol=1e-4), \
        float(jnp.max(jnp.abs(weights - ref_w)))

    print("KERNEL_OK")
</pallas_src>

<mosaic_0001>
module attributes {stable_mosaic.version = 11 : i64} {
  func.func @_attention_kernel(%arg0: i32, %arg1: memref<1x8x32xf32, #tpu.memory_space<vmem>>, %arg2: memref<4x32x8xf32, #tpu.memory_space<vmem>>, %arg3: memref<4x32x8xf32, #tpu.memory_space<vmem>>, %arg4: memref<4x32x8xf32, #tpu.memory_space<vmem>>, %arg5: memref<4x8x32xf32, #tpu.memory_space<vmem>>, %arg6: memref<4x1x8xf32, #tpu.memory_space<vmem>>, %arg7: memref<4x1x8xf32, #tpu.memory_space<vmem>>, %arg8: memref<4x1x8xf32, #tpu.memory_space<vmem>>, %arg9: memref<1x32xf32, #tpu.memory_space<vmem>>, %arg10: memref<1x8x32xf32, #tpu.memory_space<vmem>>, %arg11: memref<1x4x8x8xf32, #tpu.memory_space<vmem>>) attributes {dimension_semantics = [#tpu.dimension_semantics<parallel>], iteration_bounds = array<i64: 2>, scalar_prefetch = 0 : i64, scratch_operands = 0 : i64, tpu.core_type = #tpu.core_type<tc>, window_params = [{transform_indices = @transform_0, window_bounds = array<i64: 1, 8, 32>}, {pipeline_mode = #tpu.pipeline_mode<synchronous>, transform_indices = @transform_1, window_bounds = array<i64: 4, 32, 8>}, {pipeline_mode = #tpu.pipeline_mode<synchronous>, transform_indices = @transform_2, window_bounds = array<i64: 4, 32, 8>}, {pipeline_mode = #tpu.pipeline_mode<synchronous>, transform_indices = @transform_3, window_bounds = array<i64: 4, 32, 8>}, {pipeline_mode = #tpu.pipeline_mode<synchronous>, transform_indices = @transform_4, window_bounds = array<i64: 4, 8, 32>}, {pipeline_mode = #tpu.pipeline_mode<synchronous>, transform_indices = @transform_5, window_bounds = array<i64: 4, 1, 8>}, {pipeline_mode = #tpu.pipeline_mode<synchronous>, transform_indices = @transform_6, window_bounds = array<i64: 4, 1, 8>}, {pipeline_mode = #tpu.pipeline_mode<synchronous>, transform_indices = @transform_7, window_bounds = array<i64: 4, 1, 8>}, {pipeline_mode = #tpu.pipeline_mode<synchronous>, transform_indices = @transform_8, window_bounds = array<i64: 1, 32>}, {transform_indices = @transform_9, window_bounds = array<i64: 1, 8, 32>}, {transform_indices = @transform_10, window_bounds = array<i64: 1, 4, 8, 8>}]} {
    %c0 = arith.constant 0 : index
    %c0_0 = arith.constant 0 : index
    %c0_1 = arith.constant 0 : index
    %0 = vector.load %arg1[%c0, %c0_0, %c0_1] : memref<1x8x32xf32, #tpu.memory_space<vmem>>, vector<1x8x32xf32>
    %1 = vector.shape_cast %0 : vector<1x8x32xf32> to vector<8x32xf32>
    %c0_2 = arith.constant 0 : index
    %c0_3 = arith.constant 0 : index
    %c0_4 = arith.constant 0 : index
    %2 = vector.load %arg2[%c0_2, %c0_3, %c0_4] : memref<4x32x8xf32, #tpu.memory_space<vmem>>, vector<1x32x8xf32>
    %3 = vector.shape_cast %2 : vector<1x32x8xf32> to vector<32x8xf32>
    %cst = arith.constant dense<0.000000e+00> : vector<8x8xf32>
    %4 = tpu.matmul %1, %3, %cst {dimension_numbers = #tpu.dot_dimension_numbers<[1], [0], [0], [1], [0, 0, 1, 1], [], []>} : vector<8x32xf32>, vector<32x8xf32>, vector<8x8xf32> -> vector<8x8xf32>
    %c0_5 = arith.constant 0 : index
    %c0_6 = arith.constant 0 : index
    %c0_7 = arith.constant 0 : index
    %5 = vector.load %arg6[%c0_5, %c0_6, %c0_7] : memref<4x1x8xf32, #tpu.memory_space<vmem>>, vector<1x1x8xf32>
    %6 = vector.shape_cast %5 : vector<1x1x8xf32> to vector<1x8xf32>
    %7 = vector.broadcast %6 : vector<1x8xf32> to vector<8x8xf32>
    %8 = arith.addf %4, %7 : vector<8x8xf32>
    %c0_8 = arith.constant 0 : index
    %c0_9 = arith.constant 0 : index
    %c0_10 = arith.constant 0 : index
    %9 = vector.load %arg3[%c0_8, %c0_9, %c0_10] : memref<4x32x8xf32, #tpu.memory_space<vmem>>, vector<1x32x8xf32>
    %10 = vector.shape_cast %9 : vector<1x32x8xf32> to vector<32x8xf32>
    %cst_11 = arith.constant dense<0.000000e+00> : vector<8x8xf32>
    %11 = tpu.matmul %1, %10, %cst_11 {dimension_numbers = #tpu.dot_dimension_numbers<[1], [0], [0], [1], [0, 0, 1, 1], [], []>} : vector<8x32xf32>, vector<32x8xf32>, vector<8x8xf32> -> vector<8x8xf32>
    %c0_12 = arith.constant 0 : index
    %c0_13 = arith.constant 0 : index
    %c0_14 = arith.constant 0 : index
    %12 = vector.load %arg7[%c0_12, %c0_13, %c0_14] : memref<4x1x8xf32, #tpu.memory_space<vmem>>, vector<1x1x8xf32>
    %13 = vector.shape_cast %12 : vector<1x1x8xf32> to vector<1x8xf32>
    %14 = vector.broadcast %13 : vector<1x8xf32> to vector<8x8xf32>
    %15 = arith.addf %11, %14 : vector<8x8xf32>
    %c0_15 = arith.constant 0 : index
    %c0_16 = arith.constant 0 : index
    %c0_17 = arith.constant 0 : index
    %16 = vector.load %arg4[%c0_15, %c0_16, %c0_17] : memref<4x32x8xf32, #tpu.memory_space<vmem>>, vector<1x32x8xf32>
    %17 = vector.shape_cast %16 : vector<1x32x8xf32> to vector<32x8xf32>
    %cst_18 = arith.constant dense<0.000000e+00> : vector<8x8xf32>
    %18 = tpu.matmul %1, %17, %cst_18 {dimension_numbers = #tpu.dot_dimension_numbers<[1], [0], [0], [1], [0, 0, 1, 1], [], []>} : vector<8x32xf32>, vector<32x8xf32>, vector<8x8xf32> -> vector<8x8xf32>
    %c0_19 = arith.constant 0 : index
    %c0_20 = arith.constant 0 : index
    %c0_21 = arith.constant 0 : index
    %19 = vector.load %arg8[%c0_19, %c0_20, %c0_21] : memref<4x1x8xf32, #tpu.memory_space<vmem>>, vector<1x1x8xf32>
    %20 = vector.shape_cast %19 : vector<1x1x8xf32> to vector<1x8xf32>
    %21 = vector.broadcast %20 : vector<1x8xf32> to vector<8x8xf32>
    %22 = arith.addf %18, %21 : vector<8x8xf32>
    "tpu.trace_start"() <{level = 10 : i32, message = "qd,kd->qk"}> : () -> ()
    %cst_22 = arith.constant dense<0.000000e+00> : vector<8x8xf32>
    %23 = tpu.matmul %8, %15, %cst_22 {dimension_numbers = #tpu.dot_dimension_numbers<[1], [1], [0], [0], [0, 0, 1, 0], [], []>} : vector<8x8xf32>, vector<8x8xf32>, vector<8x8xf32> -> vector<8x8xf32>
    "tpu.trace_stop"() : () -> ()
    %cst_23 = arith.constant 0.353553385 : f32
    %24 = vector.broadcast %cst_23 : f32 to vector<8x8xf32>
    %25 = arith.mulf %23, %24 : vector<8x8xf32>
    %cst_24 = arith.constant dense<0xFF800000> : vector<8xf32>
    %26 = vector.multi_reduction <maximumf>, %25, %cst_24 [1] : vector<8x8xf32> to vector<8xf32>
    %27 = vector.shape_cast %26 : vector<8xf32> to vector<8x1xf32>
    %28 = vector.broadcast %27 : vector<8x1xf32> to vector<8x8xf32>
    %29 = arith.subf %25, %28 : vector<8x8xf32>
    %30 = math.exp %29 : vector<8x8xf32>
    %cst_25 = arith.constant dense<0.000000e+00> : vector<8xf32>
    %31 = vector.multi_reduction <add>, %30, %cst_25 [1] : vector<8x8xf32> to vector<8xf32>
    %32 = vector.shape_cast %31 : vector<8xf32> to vector<8x1xf32>
    %33 = vector.broadcast %32 : vector<8x1xf32> to vector<8x8xf32>
    %34 = arith.divf %30, %33 : vector<8x8xf32>
    %c0_26 = arith.constant 0 : index
    %c0_27 = arith.constant 0 : index
    %c0_28 = arith.constant 0 : index
    %c0_29 = arith.constant 0 : index
    %35 = vector.load %arg11[%c0_26, %c0_27, %c0_28, %c0_29] : memref<1x4x8x8xf32, #tpu.memory_space<vmem>>, vector<1x1x8x8xf32>
    %36 = vector.shape_cast %35 : vector<1x1x8x8xf32> to vector<8x8xf32>
    %37 = vector.shape_cast %34 : vector<8x8xf32> to vector<1x1x8x8xf32>
    tpu.vector_store %arg11[%c0_26, %c0_27, %c0_28, %c0_29], %37 {strides = array<i32>} : memref<1x4x8x8xf32, #tpu.memory_space<vmem>>, vector<1x1x8x8xf32>,
    %cst_30 = arith.constant dense<0.000000e+00> : vector<8x8xf32>
    %38 = tpu.matmul %34, %22, %cst_30 {dimension_numbers = #tpu.dot_dimension_numbers<[1], [0], [0], [1], [0, 0, 1, 1], [], []>} : vector<8x8xf32>, vector<8x8xf32>, vector<8x8xf32> -> vector<8x8xf32>
    %c0_31 = arith.constant 0 : index
    %c0_32 = arith.constant 0 : index
    %c0_33 = arith.constant 0 : index
    %39 = vector.load %arg5[%c0_31, %c0_32, %c0_33] : memref<4x8x32xf32, #tpu.memory_space<vmem>>, vector<1x8x32xf32>
    %40 = vector.shape_cast %39 : vector<1x8x32xf32> to vector<8x32xf32>
    %cst_34 = arith.constant dense<0.000000e+00> : vector<8x32xf32>
    %41 = tpu.matmul %38, %40, %cst_34 {dimension_numbers = #tpu.dot_dimension_numbers<[1], [0], [0], [1], [0, 0, 1, 1], [], []>} : vector<8x8xf32>, vector<8x32xf32>, vector<8x32xf32> -> vector<8x32xf32>
    %c1 = arith.constant 1 : index
    %c0_35 = arith.constant 0 : index
    %c0_36 = arith.constant 0 : index
    %42 = vector.load %arg2[%c1, %c0_35, %c0_36] : memref<4x32x8xf32, #tpu.memory_space<vmem>>, vector<1x32x8xf32>
    %43 = vector.shape_cast %42 : vector<1x32x8xf32> to vector<32x8xf32>
    %cst_37 = arith.constant dense<0.000000e+00> : vector<8x8xf32>
    %44 = tpu.matmul %1, %43, %cst_37 {dimension_numbers = #tpu.dot_dimension_numbers<[1], [0], [0], [1], [0, 0, 1, 1], [], []>} : vector<8x32xf32>, vector<32x8xf32>, vector<8x8xf32> -> vector<8x8xf32>
    %c1_38 = arith.constant 1 : index
    %c0_39 = arith.constant 0 : index
    %c0_40 = arith.constant 0 : index
    %45 = vector.load %arg6[%c1_38, %c0_39, %c0_40] : memref<4x1x8xf32, #tpu.memory_space<vmem>>, vector<1x1x8xf32>
    %46 = vector.shape_cast %45 : vector<1x1x8xf32> to vector<1x8xf32>
    %47 = vector.broadcast %46 : vector<1x8xf32> to vector<8x8xf32>
    %48 = arith.addf %44, %47 : vector<8x8xf32>
    %c1_41 = arith.constant 1 : index
    %c0_42 = arith.constant 0 : index
    %c0_43 = arith.constant 0 : index
    %49 = vector.load %arg3[%c1_41, %c0_42, %c0_43] : memref<4x32x8xf32, #tpu.memory_space<vmem>>, vector<1x32x8xf32>
    %50 = vector.shape_cast %49 : vector<1x32x8xf32> to vector<32x8xf32>
    %cst_44 = arith.constant dense<0.000000e+00> : vector<8x8xf32>
    %51 = tpu.matmul %1, %50, %cst_44 {dimension_numbers = #tpu.dot_dimension_numbers<[1], [0], [0], [1], [0, 0, 1, 1], [], []>} : vector<8x32xf32>, vector<32x8xf32>, vector<8x8xf32> -> vector<8x8xf32>
    %c1_45 = arith.constant 1 : index
    %c0_46 = arith.constant 0 : index
    %c0_47 = arith.constant 0 : index
    %52 = vector.load %arg7[%c1_45, %c0_46, %c0_47] : memref<4x1x8xf32, #tpu.memory_space<vmem>>, vector<1x1x8xf32>
    %53 = vector.shape_cast %52 : vector<1x1x8xf32> to vector<1x8xf32>
    %54 = vector.broadcast %53 : vector<1x8xf32> to vector<8x8xf32>
    %55 = arith.addf %51, %54 : vector<8x8xf32>
    %c1_48 = arith.constant 1 : index
    %c0_49 = arith.constant 0 : index
    %c0_50 = arith.constant 0 : index
    %56 = vector.load %arg4[%c1_48, %c0_49, %c0_50] : memref<4x32x8xf32, #tpu.memory_space<vmem>>, vector<1x32x8xf32>
    %57 = vector.shape_cast %56 : vector<1x32x8xf32> to vector<32x8xf32>
    %cst_51 = arith.constant dense<0.000000e+00> : vector<8x8xf32>
    %58 = tpu.matmul %1, %57, %cst_51 {dimension_numbers = #tpu.dot_dimension_numbers<[1], [0], [0], [1], [0, 0, 1, 1], [], []>} : vector<8x32xf32>, vector<32x8xf32>, vector<8x8xf32> -> vector<8x8xf32>
    %c1_52 = arith.constant 1 : index
    %c0_53 = arith.constant 0 : index
    %c0_54 = arith.constant 0 : index
    %59 = vector.load %arg8[%c1_52, %c0_53, %c0_54] : memref<4x1x8xf32, #tpu.memory_space<vmem>>, vector<1x1x8xf32>
    %60 = vector.shape_cast %59 : vector<1x1x8xf32> to vector<1x8xf32>
    %61 = vector.broadcast %60 : vector<1x8xf32> to vector<8x8xf32>
    %62 = arith.addf %58, %61 : vector<8x8xf32>
    "tpu.trace_start"() <{level = 10 : i32, message = "qd,kd->qk"}> : () -> ()
    %cst_55 = arith.constant dense<0.000000e+00> : vector<8x8xf32>
    %63 = tpu.matmul %48, %55, %cst_55 {dimension_numbers = #tpu.dot_dimension_numbers<[1], [1], [0], [0], [0, 0, 1, 0], [], []>} : vector<8x8xf32>, vector<8x8xf32>, vector<8x8xf32> -> vector<8x8xf32>
    "tpu.trace_stop"() : () -> ()
    %cst_56 = arith.constant 0.353553385 : f32
    %64 = vector.broadcast %cst_56 : f32 to vector<8x8xf32>
    %65 = arith.mulf %63, %64 : vector<8x8xf32>
    %cst_57 = arith.constant dense<0xFF800000> : vector<8xf32>
    %66 = vector.multi_reduction <maximumf>, %65, %cst_57 [1] : vector<8x8xf32> to vector<8xf32>
    %67 = vector.shape_cast %66 : vector<8xf32> to vector<8x1xf32>
    %68 = vector.broadcast %67 : vector<8x1xf32> to vector<8x8xf32>
    %69 = arith.subf %65, %68 : vector<8x8xf32>
    %70 = math.exp %69 : vector<8x8xf32>
    %cst_58 = arith.constant dense<0.000000e+00> : vector<8xf32>
    %71 = vector.multi_reduction <add>, %70, %cst_58 [1] : vector<8x8xf32> to vector<8xf32>
    %72 = vector.shape_cast %71 : vector<8xf32> to vector<8x1xf32>
    %73 = vector.broadcast %72 : vector<8x1xf32> to vector<8x8xf32>
    %74 = arith.divf %70, %73 : vector<8x8xf32>
    %c0_59 = arith.constant 0 : index
    %c1_60 = arith.constant 1 : index
    %c0_61 = arith.constant 0 : index
    %c0_62 = arith.constant 0 : index
    %75 = vector.load %arg11[%c0_59, %c1_60, %c0_61, %c0_62] : memref<1x4x8x8xf32, #tpu.memory_space<vmem>>, vector<1x1x8x8xf32>
    %76 = vector.shape_cast %75 : vector<1x1x8x8xf32> to vector<8x8xf32>
    %77 = vector.shape_cast %74 : vector<8x8xf32> to vector<1x1x8x8xf32>
    tpu.vector_store %arg11[%c0_59, %c1_60, %c0_61, %c0_62], %77 {strides = array<i32>} : memref<1x4x8x8xf32, #tpu.memory_space<vmem>>, vector<1x1x8x8xf32>,
    %cst_63 = arith.constant dense<0.000000e+00> : vector<8x8xf32>
    %78 = tpu.matmul %74, %62, %cst_63 {dimension_numbers = #tpu.dot_dimension_numbers<[1], [0], [0], [1], [0, 0, 1, 1], [], []>} : vector<8x8xf32>, vector<8x8xf32>, vector<8x8xf32> -> vector<8x8xf32>
    %c1_64 = arith.constant 1 : index
    %c0_65 = arith.constant 0 : index
    %c0_66 = arith.constant 0 : index
    %79 = vector.load %arg5[%c1_64, %c0_65, %c0_66] : memref<4x8x32xf32, #tpu.memory_space<vmem>>, vector<1x8x32xf32>
    %80 = vector.shape_cast %79 : vector<1x8x32xf32> to vector<8x32xf32>
    %cst_67 = arith.constant dense<0.000000e+00> : vector<8x32xf32>
    %81 = tpu.matmul %78, %80, %cst_67 {dimension_numbers = #tpu.dot_dimension_numbers<[1], [0], [0], [1], [0, 0, 1, 1], [], []>} : vector<8x8xf32>, vector<8x32xf32>, vector<8x32xf32> -> vector<8x32xf32>
    %82 = arith.addf %41, %81 : vector<8x32xf32>
    %c2 = arith.constant 2 : index
    %c0_68 = arith.constant 0 : index
    %c0_69 = arith.constant 0 : index
    %83 = vector.load %arg2[%c2, %c0_68, %c0_69] : memref<4x32x8xf32, #tpu.memory_space<vmem>>, vector<1x32x8xf32>
    %84 = vector.shape_cast %83 : vector<1x32x8xf32> to vector<32x8xf32>
    %cst_70 = arith.constant dense<0.000000e+00> : vector<8x8xf32>
    %85 = tpu.matmul %1, %84, %cst_70 {dimension_numbers = #tpu.dot_dimension_numbers<[1], [0], [0], [1], [0, 0, 1, 1], [], []>} : vector<8x32xf32>, vector<32x8xf32>, vector<8x8xf32> -> vector<8x8xf32>
    %c2_71 = arith.constant 2 : index
    %c0_72 = arith.constant 0 : index
    %c0_73 = arith.constant 0 : index
    %86 = vector.load %arg6[%c2_71, %c0_72, %c0_73] : memref<4x1x8xf32, #tpu.memory_space<vmem>>, vector<1x1x8xf32>
    %87 = vector.shape_cast %86 : vector<1x1x8xf32> to vector<1x8xf32>
    %88 = vector.broadcast %87 : vector<1x8xf32> to vector<8x8xf32>
    %89 = arith.addf %85, %88 : vector<8x8xf32>
    %c2_74 = arith.constant 2 : index
    %c0_75 = arith.constant 0 : index
    %c0_76 = arith.constant 0 : index
    %90 = vector.load %arg3[%c2_74, %c0_75, %c0_76] : memref<4x32x8xf32, #tpu.memory_space<vmem>>, vector<1x32x8xf32>
    %91 = vector.shape_cast %90 : vector<1x32x8xf32> to vector<32x8xf32>
    %cst_77 = arith.constant dense<0.000000e+00> : vector<8x8xf32>
    %92 = tpu.matmul %1, %91, %cst_77 {dimension_numbers = #tpu.dot_dimension_numbers<[1], [0], [0], [1], [0, 0, 1, 1], [], []>} : vector<8x32xf32>, vector<32x8xf32>, vector<8x8xf32> -> vector<8x8xf32>
    %c2_78 = arith.constant 2 : index
    %c0_79 = arith.constant 0 : index
    %c0_80 = arith.constant 0 : index
    %93 = vector.load %arg7[%c2_78, %c0_79, %c0_80] : memref<4x1x8xf32, #tpu.memory_space<vmem>>, vector<1x1x8xf32>
    %94 = vector.shape_cast %93 : vector<1x1x8xf32> to vector<1x8xf32>
    %95 = vector.broadcast %94 : vector<1x8xf32> to vector<8x8xf32>
    %96 = arith.addf %92, %95 : vector<8x8xf32>
    %c2_81 = arith.constant 2 : index
    %c0_82 = arith.constant 0 : index
    %c0_83 = arith.constant 0 : index
    %97 = vector.load %arg4[%c2_81, %c0_82, %c0_83] : memref<4x32x8xf32, #tpu.memory_space<vmem>>, vector<1x32x8xf32>
    %98 = vector.shape_cast %97 : vector<1x32x8xf32> to vector<32x8xf32>
    %cst_84 = arith.constant dense<0.000000e+00> : vector<8x8xf32>
    %99 = tpu.matmul %1, %98, %cst_84 {dimension_numbers = #tpu.dot_dimension_numbers<[1], [0], [0], [1], [0, 0, 1, 1], [], []>} : vector<8x32xf32>, vector<32x8xf32>, vector<8x8xf32> -> vector<8x8xf32>
    %c2_85 = arith.constant 2 : index
    %c0_86 = arith.constant 0 : index
    %c0_87 = arith.constant 0 : index
    %100 = vector.load %arg8[%c2_85, %c0_86, %c0_87] : memref<4x1x8xf32, #tpu.memory_space<vmem>>, vector<1x1x8xf32>
    %101 = vector.shape_cast %100 : vector<1x1x8xf32> to vector<1x8xf32>
    %102 = vector.broadcast %101 : vector<1x8xf32> to vector<8x8xf32>
    %103 = arith.addf %99, %102 : vector<8x8xf32>
    "tpu.trace_start"() <{level = 10 : i32, message = "qd,kd->qk"}> : () -> ()
    %cst_88 = arith.constant dense<0.000000e+00> : vector<8x8xf32>
    %104 = tpu.matmul %89, %96, %cst_88 {dimension_numbers = #tpu.dot_dimension_numbers<[1], [1], [0], [0], [0, 0, 1, 0], [], []>} : vector<8x8xf32>, vector<8x8xf32>, vector<8x8xf32> -> vector<8x8xf32>
    "tpu.trace_stop"() : () -> ()
    %cst_89 = arith.constant 0.353553385 : f32
    %105 = vector.broadcast %cst_89 : f32 to vector<8x8xf32>
    %106 = arith.mulf %104, %105 : vector<8x8xf32>
    %cst_90 = arith.constant dense<0xFF800000> : vector<8xf32>
    %107 = vector.multi_reduction <maximumf>, %106, %cst_90 [1] : vector<8x8xf32> to vector<8xf32>
    %108 = vector.shape_cast %107 : vector<8xf32> to vector<8x1xf32>
    %109 = vector.broadcast %108 : vector<8x1xf32> to vector<8x8xf32>
    %110 = arith.subf %106, %109 : vector<8x8xf32>
    %111 = math.exp %110 : vector<8x8xf32>
    %cst_91 = arith.constant dense<0.000000e+00> : vector<8xf32>
    %112 = vector.multi_reduction <add>, %111, %cst_91 [1] : vector<8x8xf32> to vector<8xf32>
    %113 = vector.shape_cast %112 : vector<8xf32> to vector<8x1xf32>
    %114 = vector.broadcast %113 : vector<8x1xf32> to vector<8x8xf32>
    %115 = arith.divf %111, %114 : vector<8x8xf32>
    %c0_92 = arith.constant 0 : index
    %c2_93 = arith.constant 2 : index
    %c0_94 = arith.constant 0 : index
    %c0_95 = arith.constant 0 : index
    %116 = vector.load %arg11[%c0_92, %c2_93, %c0_94, %c0_95] : memref<1x4x8x8xf32, #tpu.memory_space<vmem>>, vector<1x1x8x8xf32>
    %117 = vector.shape_cast %116 : vector<1x1x8x8xf32> to vector<8x8xf32>
    %118 = vector.shape_cast %115 : vector<8x8xf32> to vector<1x1x8x8xf32>
    tpu.vector_store %arg11[%c0_92, %c2_93, %c0_94, %c0_95], %118 {strides = array<i32>} : memref<1x4x8x8xf32, #tpu.memory_space<vmem>>, vector<1x1x8x8xf32>,
    %cst_96 = arith.constant dense<0.000000e+00> : vector<8x8xf32>
    %119 = tpu.matmul %115, %103, %cst_96 {dimension_numbers = #tpu.dot_dimension_numbers<[1], [0], [0], [1], [0, 0, 1, 1], [], []>} : vector<8x8xf32>, vector<8x8xf32>, vector<8x8xf32> -> vector<8x8xf32>
    %c2_97 = arith.constant 2 : index
    %c0_98 = arith.constant 0 : index
    %c0_99 = arith.constant 0 : index
    %120 = vector.load %arg5[%c2_97, %c0_98, %c0_99] : memref<4x8x32xf32, #tpu.memory_space<vmem>>, vector<1x8x32xf32>
    %121 = vector.shape_cast %120 : vector<1x8x32xf32> to vector<8x32xf32>
    %cst_100 = arith.constant dense<0.000000e+00> : vector<8x32xf32>
    %122 = tpu.matmul %119, %121, %cst_100 {dimension_numbers = #tpu.dot_dimension_numbers<[1], [0], [0], [1], [0, 0, 1, 1], [], []>} : vector<8x8xf32>, vector<8x32xf32>, vector<8x32xf32> -> vector<8x32xf32>
    %123 = arith.addf %82, %122 : vector<8x32xf32>
    %c3 = arith.constant 3 : index
    %c0_101 = arith.constant 0 : index
    %c0_102 = arith.constant 0 : index
    %124 = vector.load %arg2[%c3, %c0_101, %c0_102] : memref<4x32x8xf32, #tpu.memory_space<vmem>>, vector<1x32x8xf32>
    %125 = vector.shape_cast %124 : vector<1x32x8xf32> to vector<32x8xf32>
    %cst_103 = arith.constant dense<0.000000e+00> : vector<8x8xf32>
    %126 = tpu.matmul %1, %125, %cst_103 {dimension_numbers = #tpu.dot_dimension_numbers<[1], [0], [0], [1], [0, 0, 1, 1], [], []>} : vector<8x32xf32>, vector<32x8xf32>, vector<8x8xf32> -> vector<8x8xf32>
    %c3_104 = arith.constant 3 : index
    %c0_105 = arith.constant 0 : index
    %c0_106 = arith.constant 0 : index
    %127 = vector.load %arg6[%c3_104, %c0_105, %c0_106] : memref<4x1x8xf32, #tpu.memory_space<vmem>>, vector<1x1x8xf32>
    %128 = vector.shape_cast %127 : vector<1x1x8xf32> to vector<1x8xf32>
    %129 = vector.broadcast %128 : vector<1x8xf32> to vector<8x8xf32>
    %130 = arith.addf %126, %129 : vector<8x8xf32>
    %c3_107 = arith.constant 3 : index
    %c0_108 = arith.constant 0 : index
    %c0_109 = arith.constant 0 : index
    %131 = vector.load %arg3[%c3_107, %c0_108, %c0_109] : memref<4x32x8xf32, #tpu.memory_space<vmem>>, vector<1x32x8xf32>
    %132 = vector.shape_cast %131 : vector<1x32x8xf32> to vector<32x8xf32>
    %cst_110 = arith.constant dense<0.000000e+00> : vector<8x8xf32>
    %133 = tpu.matmul %1, %132, %cst_110 {dimension_numbers = #tpu.dot_dimension_numbers<[1], [0], [0], [1], [0, 0, 1, 1], [], []>} : vector<8x32xf32>, vector<32x8xf32>, vector<8x8xf32> -> vector<8x8xf32>
    %c3_111 = arith.constant 3 : index
    %c0_112 = arith.constant 0 : index
    %c0_113 = arith.constant 0 : index
    %134 = vector.load %arg7[%c3_111, %c0_112, %c0_113] : memref<4x1x8xf32, #tpu.memory_space<vmem>>, vector<1x1x8xf32>
    %135 = vector.shape_cast %134 : vector<1x1x8xf32> to vector<1x8xf32>
    %136 = vector.broadcast %135 : vector<1x8xf32> to vector<8x8xf32>
    %137 = arith.addf %133, %136 : vector<8x8xf32>
    %c3_114 = arith.constant 3 : index
    %c0_115 = arith.constant 0 : index
    %c0_116 = arith.constant 0 : index
    %138 = vector.load %arg4[%c3_114, %c0_115, %c0_116] : memref<4x32x8xf32, #tpu.memory_space<vmem>>, vector<1x32x8xf32>
    %139 = vector.shape_cast %138 : vector<1x32x8xf32> to vector<32x8xf32>
    %cst_117 = arith.constant dense<0.000000e+00> : vector<8x8xf32>
    %140 = tpu.matmul %1, %139, %cst_117 {dimension_numbers = #tpu.dot_dimension_numbers<[1], [0], [0], [1], [0, 0, 1, 1], [], []>} : vector<8x32xf32>, vector<32x8xf32>, vector<8x8xf32> -> vector<8x8xf32>
    %c3_118 = arith.constant 3 : index
    %c0_119 = arith.constant 0 : index
    %c0_120 = arith.constant 0 : index
    %141 = vector.load %arg8[%c3_118, %c0_119, %c0_120] : memref<4x1x8xf32, #tpu.memory_space<vmem>>, vector<1x1x8xf32>
    %142 = vector.shape_cast %141 : vector<1x1x8xf32> to vector<1x8xf32>
    %143 = vector.broadcast %142 : vector<1x8xf32> to vector<8x8xf32>
    %144 = arith.addf %140, %143 : vector<8x8xf32>
    "tpu.trace_start"() <{level = 10 : i32, message = "qd,kd->qk"}> : () -> ()
    %cst_121 = arith.constant dense<0.000000e+00> : vector<8x8xf32>
    %145 = tpu.matmul %130, %137, %cst_121 {dimension_numbers = #tpu.dot_dimension_numbers<[1], [1], [0], [0], [0, 0, 1, 0], [], []>} : vector<8x8xf32>, vector<8x8xf32>, vector<8x8xf32> -> vector<8x8xf32>
    "tpu.trace_stop"() : () -> ()
    %cst_122 = arith.constant 0.353553385 : f32
    %146 = vector.broadcast %cst_122 : f32 to vector<8x8xf32>
    %147 = arith.mulf %145, %146 : vector<8x8xf32>
    %cst_123 = arith.constant dense<0xFF800000> : vector<8xf32>
    %148 = vector.multi_reduction <maximumf>, %147, %cst_123 [1] : vector<8x8xf32> to vector<8xf32>
    %149 = vector.shape_cast %148 : vector<8xf32> to vector<8x1xf32>
    %150 = vector.broadcast %149 : vector<8x1xf32> to vector<8x8xf32>
    %151 = arith.subf %147, %150 : vector<8x8xf32>
    %152 = math.exp %151 : vector<8x8xf32>
    %cst_124 = arith.constant dense<0.000000e+00> : vector<8xf32>
    %153 = vector.multi_reduction <add>, %152, %cst_124 [1] : vector<8x8xf32> to vector<8xf32>
    %154 = vector.shape_cast %153 : vector<8xf32> to vector<8x1xf32>
    %155 = vector.broadcast %154 : vector<8x1xf32> to vector<8x8xf32>
    %156 = arith.divf %152, %155 : vector<8x8xf32>
    %c0_125 = arith.constant 0 : index
    %c3_126 = arith.constant 3 : index
    %c0_127 = arith.constant 0 : index
    %c0_128 = arith.constant 0 : index
    %157 = vector.load %arg11[%c0_125, %c3_126, %c0_127, %c0_128] : memref<1x4x8x8xf32, #tpu.memory_space<vmem>>, vector<1x1x8x8xf32>
    %158 = vector.shape_cast %157 : vector<1x1x8x8xf32> to vector<8x8xf32>
    %159 = vector.shape_cast %156 : vector<8x8xf32> to vector<1x1x8x8xf32>
    tpu.vector_store %arg11[%c0_125, %c3_126, %c0_127, %c0_128], %159 {strides = array<i32>} : memref<1x4x8x8xf32, #tpu.memory_space<vmem>>, vector<1x1x8x8xf32>,
    %cst_129 = arith.constant dense<0.000000e+00> : vector<8x8xf32>
    %160 = tpu.matmul %156, %144, %cst_129 {dimension_numbers = #tpu.dot_dimension_numbers<[1], [0], [0], [1], [0, 0, 1, 1], [], []>} : vector<8x8xf32>, vector<8x8xf32>, vector<8x8xf32> -> vector<8x8xf32>
    %c3_130 = arith.constant 3 : index
    %c0_131 = arith.constant 0 : index
    %c0_132 = arith.constant 0 : index
    %161 = vector.load %arg5[%c3_130, %c0_131, %c0_132] : memref<4x8x32xf32, #tpu.memory_space<vmem>>, vector<1x8x32xf32>
    %162 = vector.shape_cast %161 : vector<1x8x32xf32> to vector<8x32xf32>
    %cst_133 = arith.constant dense<0.000000e+00> : vector<8x32xf32>
    %163 = tpu.matmul %160, %162, %cst_133 {dimension_numbers = #tpu.dot_dimension_numbers<[1], [0], [0], [1], [0, 0, 1, 1], [], []>} : vector<8x8xf32>, vector<8x32xf32>, vector<8x32xf32> -> vector<8x32xf32>
    %164 = arith.addf %123, %163 : vector<8x32xf32>
    %c0_134 = arith.constant 0 : index
    %c0_135 = arith.constant 0 : index
    %165 = vector.load %arg9[%c0_134, %c0_135] : memref<1x32xf32, #tpu.memory_space<vmem>>, vector<1x32xf32>
    %166 = vector.broadcast %165 : vector<1x32xf32> to vector<8x32xf32>
    %167 = arith.addf %164, %166 : vector<8x32xf32>
    %c0_136 = arith.constant 0 : index
    %c0_137 = arith.constant 0 : index
    %c0_138 = arith.constant 0 : index
    %168 = vector.load %arg10[%c0_136, %c0_137, %c0_138] : memref<1x8x32xf32, #tpu.memory_space<vmem>>, vector<1x8x32xf32>
    %169 = vector.shape_cast %168 : vector<1x8x32xf32> to vector<8x32xf32>
    %170 = vector.shape_cast %167 : vector<8x32xf32> to vector<1x8x32xf32>
    tpu.vector_store %arg10[%c0_136, %c0_137, %c0_138], %170 {strides = array<i32>} : memref<1x8x32xf32, #tpu.memory_space<vmem>>, vector<1x8x32xf32>,
    return
  }
  func.func @transform_0(%arg0: i32) -> (i32, i32, i32) {
    %c0_i32 = arith.constant 0 : i32
    %c0_i32_0 = arith.constant 0 : i32
    %c0_i32_1 = arith.constant 0 : i32
    return %arg0, %c0_i32, %c0_i32_0 : i32, i32, i32
  }
  func.func @transform_1(%arg0: i32) -> (i32, i32, i32) {
    %c0_i32 = arith.constant 0 : i32
    %c0_i32_0 = arith.constant 0 : i32
    %c0_i32_1 = arith.constant 0 : i32
    %c0_i32_2 = arith.constant 0 : i32
    return %c0_i32, %c0_i32_0, %c0_i32_1 : i32, i32, i32
  }
  func.func @transform_2(%arg0: i32) -> (i32, i32, i32) {
    %c0_i32 = arith.constant 0 : i32
    %c0_i32_0 = arith.constant 0 : i32
    %c0_i32_1 = arith.constant 0 : i32
    %c0_i32_2 = arith.constant 0 : i32
    return %c0_i32, %c0_i32_0, %c0_i32_1 : i32, i32, i32
  }
  func.func @transform_3(%arg0: i32) -> (i32, i32, i32) {
    %c0_i32 = arith.constant 0 : i32
    %c0_i32_0 = arith.constant 0 : i32
    %c0_i32_1 = arith.constant 0 : i32
    %c0_i32_2 = arith.constant 0 : i32
    return %c0_i32, %c0_i32_0, %c0_i32_1 : i32, i32, i32
  }
  func.func @transform_4(%arg0: i32) -> (i32, i32, i32) {
    %c0_i32 = arith.constant 0 : i32
    %c0_i32_0 = arith.constant 0 : i32
    %c0_i32_1 = arith.constant 0 : i32
    %c0_i32_2 = arith.constant 0 : i32
    return %c0_i32, %c0_i32_0, %c0_i32_1 : i32, i32, i32
  }
  func.func @transform_5(%arg0: i32) -> (i32, i32, i32) {
    %c0_i32 = arith.constant 0 : i32
    %c0_i32_0 = arith.constant 0 : i32
    %c0_i32_1 = arith.constant 0 : i32
    %c0_i32_2 = arith.constant 0 : i32
    return %c0_i32, %c0_i32_0, %c0_i32_1 : i32, i32, i32
  }
  func.func @transform_6(%arg0: i32) -> (i32, i32, i32) {
    %c0_i32 = arith.constant 0 : i32
    %c0_i32_0 = arith.constant 0 : i32
    %c0_i32_1 = arith.constant 0 : i32
    %c0_i32_2 = arith.constant 0 : i32
    return %c0_i32, %c0_i32_0, %c0_i32_1 : i32, i32, i32
  }
  func.func @transform_7(%arg0: i32) -> (i32, i32, i32) {
    %c0_i32 = arith.constant 0 : i32
    %c0_i32_0 = arith.constant 0 : i32
    %c0_i32_1 = arith.constant 0 : i32
    %c0_i32_2 = arith.constant 0 : i32
    return %c0_i32, %c0_i32_0, %c0_i32_1 : i32, i32, i32
  }
  func.func @transform_8(%arg0: i32) -> (i32, i32) {
    %c0_i32 = arith.constant 0 : i32
    %c0_i32_0 = arith.constant 0 : i32
    %c0_i32_1 = arith.constant 0 : i32
    return %c0_i32, %c0_i32_0 : i32, i32
  }
  func.func @transform_9(%arg0: i32) -> (i32, i32, i32) {
    %c0_i32 = arith.constant 0 : i32
    %c0_i32_0 = arith.constant 0 : i32
    %c0_i32_1 = arith.constant 0 : i32
    return %arg0, %c0_i32, %c0_i32_0 : i32, i32, i32
  }
  func.func @transform_10(%arg0: i32) -> (i32, i32, i32, i32) {
    %c0_i32 = arith.constant 0 : i32
    %c0_i32_0 = arith.constant 0 : i32
    %c0_i32_1 = arith.constant 0 : i32
    %c0_i32_2 = arith.constant 0 : i32
    return %arg0, %c0_i32, %c0_i32_0, %c0_i32_1 : i32, i32, i32, i32
  }
}

</mosaic_0001>

<llo_original>
// kernel: attention_forward.1
$region0: #{attention_forward.1}
  #allocation0 [shape = 'u32[]', space=smem, size = 0x4, offset = 0x4, fixed_abs, tag = 'smem constant byte address 0x4 - core index']
  #allocation1 [shape = 'u32[72,128]{1,0:T(1,128)}', space=vmem, size = 0x9000, scoped, tag = 'internal scratch']
  %s0 = inlined_call_operand.vmem [shape: f32[2,8,32], index: 0, kind: input, shape index: {}]
  %s1 = inlined_call_operand.vmem [shape: f32[4,32,8], index: 1, kind: input, shape index: {}]
  %s2 = inlined_call_operand.vmem [shape: f32[4,32,8], index: 2, kind: input, shape index: {}]
  %s3 = inlined_call_operand.vmem [shape: f32[4,32,8], index: 3, kind: input, shape index: {}]
  %s4 = inlined_call_operand.vmem [shape: f32[4,8,32], index: 4, kind: input, shape index: {}]
  %s5 = inlined_call_operand.vmem [shape: f32[4,1,8], index: 5, kind: input, shape index: {}]
  %s6 = inlined_call_operand.vmem [shape: f32[4,1,8], index: 6, kind: input, shape index: {}]
  %s7 = inlined_call_operand.vmem [shape: f32[4,1,8], index: 7, kind: input, shape index: {}]
  %s8 = inlined_call_operand.vmem [shape: f32[1,32], index: 8, kind: input, shape index: {}]
  %s9 = inlined_call_operand.hbm [shape: f32[2,8,32], index: 9, kind: output, shape index: {0}]
  %s10 = inlined_call_operand.hbm [shape: f32[2,4,8,8], index: 10, kind: output, shape index: {1}]
  %11 = xla_tuple %s9, %s10
  %s12 = sld [smem:[#allocation0]]
  $region77: #{attention_forward.1} parent=0
    _
  %s14 = ssub.s32 1, %s12
  %s15 = scalar_select 0, %s14, %s12
  $region1: #{attention_forward.1} parent=0
    #allocation2 [shape = 'u8[8192]{0}', space=vmem, size = 0x2000, scoped, tag = 'output window, operand 0']
    #allocation3 [shape = 's32[2]{0}', space=sflag, size = 0x8, scoped, tag = 'scoped memory for attention_forward.1']
    #allocation4 [shape = 'u8[32768]{0}', space=vmem, size = 0x8000, scoped, tag = 'output window, operand 1']
    #allocation5 [shape = 's32[2]{0}', space=sflag, size = 0x8, scoped, tag = 'scoped memory for attention_forward.1']
    %16 = vsyncpa [#allocation3], 0
    %s17 = scalar_lea.sflag [#allocation3], 1
    %18 = vsyncpa %s17, 0
    %19 = vsyncpa [#allocation5], 0
    %s20 = scalar_lea.sflag [#allocation5], 1
    %21 = vsyncpa %s20, 0
    loop: start=0, step=1, limit=4
    $region2: #{attention_forward.1} parent=1 // loop_pre_header
      _
    $region3: #{attention_forward.1} parent=1 // loop_header
      %s23 = sphi 0, %s27
      %p24 = scmp.ge.s32.totalorder %s23, 4
      %s33 = sphi 0, %s35
      %s36 = sphi 0, %s33
      %s37 = sphi 0, %s36
      %s53 = sphi 0, %s37
      %s57 = sphi 0, %s57
      %s59 = sphi 0, %s57
      %s60 = sphi 0, %s59
      %s74 = sphi 0, %s60
      %s78 = sphi 0, %s78
      %s80 = sphi 0, %s78
      %s81 = sphi 0, %s80
      %s95 = sphi 0, %s81
      %s99 = sphi 0, %s99
      %s101 = sphi 0, %s99
      %s102 = sphi 0, %s101
      %s116 = sphi 0, %s102
      %s120 = sphi 0, %s120
      %s122 = sphi 0, %s120
      %s123 = sphi 0, %s122
      %s137 = sphi 0, %s123
      %s141 = sphi 0, %s141
      %s143 = sphi 0, %s141
      %s144 = sphi 0, %s143
      %s158 = sphi 0, %s144
      %s162 = sphi 0, %s162
      %s164 = sphi 0, %s162
      %s165 = sphi 0, %s164
      %s179 = sphi 0, %s165
      %s183 = sphi 0, %s183
      %s185 = sphi 0, %s183
      %s186 = sphi 0, %s185
      %s200 = sphi 0, %s186
      %s204 = sphi 0, %s204
      %s206 = sphi 0, %s204
      %s207 = sphi 0, %s206
      %s221 = sphi 0, %s207
      %s227 = sphi 0, %s229
      %s230 = sphi 0, %s227
      %s231 = sphi 0, %s230
      %s247 = sphi 0, %s231
      %s253 = sphi 0, %s255
      %s256 = sphi 0, %s253
      %s257 = sphi 0, %s256
      %s273 = sphi 0, %s257
    $region4: #{attention_forward.1} parent=1 // loop_header_branch
      %26 = sbr.rel (%p24) target = $region8
    $region5: #{attention_forward.1} parent=1 // loop_body
      %s28 = ssub.s32 %s23, 1
      %s29 = ssub.s32 %s23, 2
      %s30 = sadd.s32 %s23, 1
      %s31 = ssub.s32 %s23, %s30
      %p32 = scmp.eq.s32.totalorder %s31, 0
      %s34 = sadd.s32 %s33, 1
      %s35 = scalar_select %p32, %s33, %s34
      %p38 = pneg %p32
      %p39 = scmp.eq.s32.totalorder %s23, 1
      %p40 = por %p38, %p39
      %p41 = scmp.ne.s32.totalorder %s33, %s36
      %p42 = scmp.eq.s32.totalorder %s23, 0
      %p43 = por %p41, %p42
      %p44 = scmp.ne.s32.totalorder %s33, %s36
      %p45 = scmp.eq.s32.totalorder %s28, 1
      %p46 = por %p44, %p45
      %p47 = scmp.ne.s32.totalorder %s36, %s37
      %p48 = scmp.eq.s32.totalorder %s28, 0
      %p49 = por %p47, %p48
      %p50 = scmp.ne.s32.totalorder %s36, %s37
      %p51 = scmp.eq.s32.totalorder %s29, 1
      %p52 = por %p50, %p51
      %p54 = scmp.ne.s32.totalorder %s37, %s53
      %p55 = scmp.eq.s32.totalorder %s29, 0
      %p56 = por %p54, %p55
      %s58 = sadd.s32 %s57, 1
      %p61 = scmp.eq.s32.totalorder %s23, 1
      %p62 = scmp.ne.s32.totalorder %s57, %s59
      %p63 = scmp.eq.s32.totalorder %s23, 0
      %p64 = por %p62, %p63
      %p65 = scmp.ne.s32.totalorder %s57, %s59
      %p66 = scmp.eq.s32.totalorder %s28, 1
      %p67 = por %p65, %p66
      %p68 = scmp.ne.s32.totalorder %s59, %s60
      %p69 = scmp.eq.s32.totalorder %s28, 0
      %p70 = por %p68, %p69
      %p71 = scmp.ne.s32.totalorder %s59, %s60
      %p72 = scmp.eq.s32.totalorder %s29, 1
      %p73 = por %p71, %p72
      %p75 = scmp.ne.s32.totalorder %s60, %s74
      %p76 = scmp.eq.s32.totalorder %s29, 0
      %p77 = por %p75, %p76
      %s79 = sadd.s32 %s78, 1
      %p82 = scmp.eq.s32.totalorder %s23, 1
      %p83 = scmp.ne.s32.totalorder %s78, %s80
      %p84 = scmp.eq.s32.totalorder %s23, 0
      %p85 = por %p83, %p84
      %p86 = scmp.ne.s32.totalorder %s78, %s80
      %p87 = scmp.eq.s32.totalorder %s28, 1
      %p88 = por %p86, %p87
      %p89 = scmp.ne.s32.totalorder %s80, %s81
      %p90 = scmp.eq.s32.totalorder %s28, 0
      %p91 = por %p89, %p90
      %p92 = scmp.ne.s32.totalorder %s80, %s81
      %p93 = scmp.eq.s32.totalorder %s29, 1
      %p94 = por %p92, %p93
      %p96 = scmp.ne.s32.totalorder %s81, %s95
      %p97 = scmp.eq.s32.totalorder %s29, 0
      %p98 = por %p96, %p97
      %s100 = sadd.s32 %s99, 1
      %p103 = scmp.eq.s32.totalorder %s23, 1
      %p104 = scmp.ne.s32.totalorder %s99, %s101
      %p105 = scmp.eq.s32.totalorder %s23, 0
      %p106 = por %p104, %p105
      %p107 = scmp.ne.s32.totalorder %s99, %s101
      %p108 = scmp.eq.s32.totalorder %s28, 1
      %p109 = por %p107, %p108
      %p110 = scmp.ne.s32.totalorder %s101, %s102
      %p111 = scmp.eq.s32.totalorder %s28, 0
      %p112 = por %p110, %p111
      %p113 = scmp.ne.s32.totalorder %s101, %s102
      %p114 = scmp.eq.s32.totalorder %s29, 1
      %p115 = por %p113, %p114
      %p117 = scmp.ne.s32.totalorder %s102, %s116
      %p118 = scmp.eq.s32.totalorder %s29, 0
      %p119 = por %p117, %p118
      %s121 = sadd.s32 %s120, 1
      %p124 = scmp.eq.s32.totalorder %s23, 1
      %p125 = scmp.ne.s32.totalorder %s120, %s122
      %p126 = scmp.eq.s32.totalorder %s23, 0
      %p127 = por %p125, %p126
      %p128 = scmp.ne.s32.totalorder %s120, %s122
      %p129 = scmp.eq.s32.totalorder %s28, 1
      %p130 = por %p128, %p129
      %p131 = scmp.ne.s32.totalorder %s122, %s123
      %p132 = scmp.eq.s32.totalorder %s28, 0
      %p133 = por %p131, %p132
      %p134 = scmp.ne.s32.totalorder %s122, %s123
      %p135 = scmp.eq.s32.totalorder %s29, 1
      %p136 = por %p134, %p135
      %p138 = scmp.ne.s32.totalorder %s123, %s137
      %p139 = scmp.eq.s32.totalorder %s29, 0
      %p140 = por %p138, %p139
      %s142 = sadd.s32 %s141, 1
      %p145 = scmp.eq.s32.totalorder %s23, 1
      %p146 = scmp.ne.s32.totalorder %s141, %s143
      %p147 = scmp.eq.s32.totalorder %s23, 0
      %p148 = por %p146, %p147
      %p149 = scmp.ne.s32.totalorder %s141, %s143
      %p150 = scmp.eq.s32.totalorder %s28, 1
      %p151 = por %p149, %p150
      %p152 = scmp.ne.s32.totalorder %s143, %s144
      %p153 = scmp.eq.s32.totalorder %s28, 0
      %p154 = por %p152, %p153
      %p155 = scmp.ne.s32.totalorder %s143, %s144
      %p156 = scmp.eq.s32.totalorder %s29, 1
      %p157 = por %p155, %p156
      %p159 = scmp.ne.s32.totalorder %s144, %s158
      %p160 = scmp.eq.s32.totalorder %s29, 0
      %p161 = por %p159, %p160
      %s163 = sadd.s32 %s162, 1
      %p166 = scmp.eq.s32.totalorder %s23, 1
      %p167 = scmp.ne.s32.totalorder %s162, %s164
      %p168 = scmp.eq.s32.totalorder %s23, 0
      %p169 = por %p167, %p168
      %p170 = scmp.ne.s32.totalorder %s162, %s164
      %p171 = scmp.eq.s32.totalorder %s28, 1
      %p172 = por %p170, %p171
      %p173 = scmp.ne.s32.totalorder %s164, %s165
      %p174 = scmp.eq.s32.totalorder %s28, 0
      %p175 = por %p173, %p174
      %p176 = scmp.ne.s32.totalorder %s164, %s165
      %p177 = scmp.eq.s32.totalorder %s29, 1
      %p178 = por %p176, %p177
      %p180 = scmp.ne.s32.totalorder %s165, %s179
      %p181 = scmp.eq.s32.totalorder %s29, 0
      %p182 = por %p180, %p181
      %s184 = sadd.s32 %s183, 1
      %p187 = scmp.eq.s32.totalorder %s23, 1
      %p188 = scmp.ne.s32.totalorder %s183, %s185
      %p189 = scmp.eq.s32.totalorder %s23, 0
      %p190 = por %p188, %p189
      %p191 = scmp.ne.s32.totalorder %s183, %s185
      %p192 = scmp.eq.s32.totalorder %s28, 1
      %p193 = por %p191, %p192
      %p194 = scmp.ne.s32.totalorder %s185, %s186
      %p195 = scmp.eq.s32.totalorder %s28, 0
      %p196 = por %p194, %p195
      %p197 = scmp.ne.s32.totalorder %s185, %s186
      %p198 = scmp.eq.s32.totalorder %s29, 1
      %p199 = por %p197, %p198
      %p201 = scmp.ne.s32.totalorder %s186, %s200
      %p202 = scmp.eq.s32.totalorder %s29, 0
      %p203 = por %p201, %p202
      %s205 = sadd.s32 %s204, 1
      %p208 = scmp.eq.s32.totalorder %s23, 1
      %p209 = scmp.ne.s32.totalorder %s204, %s206
      %p210 = scmp.eq.s32.totalorder %s23, 0
      %p211 = por %p209, %p210
      %p212 = scmp.ne.s32.totalorder %s204, %s206
      %p213 = scmp.eq.s32.totalorder %s28, 1
      %p214 = por %p212, %p213
      %p215 = scmp.ne.s32.totalorder %s206, %s207
      %p216 = scmp.eq.s32.totalorder %s28, 0
      %p217 = por %p215, %p216
      %p218 = scmp.ne.s32.totalorder %s206, %s207
      %p219 = scmp.eq.s32.totalorder %s29, 1
      %p220 = por %p218, %p219
      %p222 = scmp.ne.s32.totalorder %s207, %s221
      %p223 = scmp.eq.s32.totalorder %s29, 0
      %p224 = por %p222, %p223
      %s225 = ssub.s32 %s23, %s30
      %p226 = scmp.eq.s32.totalorder %s225, 0
      %s228 = sadd.s32 %s227, 1
      %s229 = scalar_select %p226, %s227, %s228
      %p232 = pneg %p226
      %p233 = scmp.eq.s32.totalorder %s23, 1
      %p234 = por %p232, %p233
      %p235 = scmp.ne.s32.totalorder %s227, %s230
      %p236 = scmp.eq.s32.totalorder %s23, 0
      %p237 = por %p235, %p236
      %p238 = scmp.ne.s32.totalorder %s227, %s230
      %p239 = scmp.eq.s32.totalorder %s28, 1
      %p240 = por %p238, %p239
      %p241 = scmp.ne.s32.totalorder %s230, %s231
      %p242 = scmp.eq.s32.totalorder %s28, 0
      %p243 = por %p241, %p242
      %p244 = scmp.ne.s32.totalorder %s230, %s231
      %p245 = scmp.eq.s32.totalorder %s29, 1
      %p246 = por %p244, %p245
      %p248 = scmp.ne.s32.totalorder %s231, %s247
      %p249 = scmp.eq.s32.totalorder %s29, 0
      %p250 = por %p248, %p249
      %s251 = ssub.s32 %s23, %s30
      %p252 = scmp.eq.s32.totalorder %s251, 0
      %s254 = sadd.s32 %s253, 1
      %s255 = scalar_select %p252, %s253, %s254
      %p258 = pneg %p252
      %p259 = scmp.eq.s32.totalorder %s23, 1
      %p260 = por %p258, %p259
      %p261 = scmp.ne.s32.totalorder %s253, %s256
      %p262 = scmp.eq.s32.totalorder %s23, 0
      %p263 = por %p261, %p262
      %p264 = scmp.ne.s32.totalorder %s253, %s256
      %p265 = scmp.eq.s32.totalorder %s28, 1
      %p266 = por %p264, %p265
      %p267 = scmp.ne.s32.totalorder %s256, %s257
      %p268 = scmp.eq.s32.totalorder %s28, 0
      %p269 = por %p267, %p268
      %p270 = scmp.ne.s32.totalorder %s256, %s257
      %p271 = scmp.eq.s32.totalorder %s29, 1
      %p272 = por %p270, %p271
      %p274 = scmp.ne.s32.totalorder %s257, %s273
      %p275 = scmp.eq.s32.totalorder %s29, 0
      %p276 = por %p274, %p275
      %p277 = scmp.le.s32.totalorder 1, %s23
      %p278 = scmp.lt.s32.totalorder %s23, 3
      %p279 = pnand %p277, %p278
      %p280 = pneg %p279
      // Predicated region
      $region9: #{attention_forward.1} parent=5 // pred_check
        _
      $region10: #{attention_forward.1} parent=5 // pred_check_branch
        %282 = sbr.rel (%p279) target = $region12
      $region11: #{attention_forward.1} parent=5 // pred_region
        %s283 = ssub.s32 %s23, 1
        // Predicated region
        $region13: #{attention_forward.1} parent=11 // pred_check
          %p284 = pneg %p70
        $region14: #{attention_forward.1} parent=11 // pred_check_branch
          %286 = sbr.rel (%p284) target = $region16
        $region15: #{attention_forward.1} parent=11 // pred_region
          _
        $region16: #{attention_forward.1} parent=11 // pred_fallthru
          _
        // Predicated region
        $region17: #{attention_forward.1} parent=11 // pred_check
          %p287 = pneg %p91
        $region18: #{attention_forward.1} parent=11 // pred_check_branch
          %289 = sbr.rel (%p287) target = $region20
        $region19: #{attention_forward.1} parent=11 // pred_region
          _
        $region20: #{attention_forward.1} parent=11 // pred_fallthru
          _
        // Predicated region
        $region21: #{attention_forward.1} parent=11 // pred_check
          %p290 = pneg %p112
        $region22: #{attention_forward.1} parent=11 // pred_check_branch
          %292 = sbr.rel (%p290) target = $region24
        $region23: #{attention_forward.1} parent=11 // pred_region
          _
        $region24: #{attention_forward.1} parent=11 // pred_fallthru
          _
        // Predicated region
        $region25: #{attention_forward.1} parent=11 // pred_check
          %p293 = pneg %p133
        $region26: #{attention_forward.1} parent=11 // pred_check_branch
          %295 = sbr.rel (%p293) target = $region28
        $region27: #{attention_forward.1} parent=11 // pred_region
          _
        $region28: #{attention_forward.1} parent=11 // pred_fallthru
          _
        // Predicated region
        $region29: #{attention_forward.1} parent=11 // pred_check
          %p296 = pneg %p154
        $region30: #{attention_forward.1} parent=11 // pred_check_branch
          %298 = sbr.rel (%p296) target = $region32
        $region31: #{attention_forward.1} parent=11 // pred_region
          _
        $region32: #{attention_forward.1} parent=11 // pred_fallthru
          _
        // Predicated region
        $region33: #{attention_forward.1} parent=11 // pred_check
          %p299 = pneg %p175
        $region34: #{attention_forward.1} parent=11 // pred_check_branch
          %301 = sbr.rel (%p299) target = $region36
        $region35: #{attention_forward.1} parent=11 // pred_region
          _
        $region36: #{attention_forward.1} parent=11 // pred_fallthru
          _
        // Predicated region
        $region37: #{attention_forward.1} parent=11 // pred_check
          %p302 = pneg %p196
        $region38: #{attention_forward.1} parent=11 // pred_check_branch
          %304 = sbr.rel (%p302) target = $region40
        $region39: #{attention_forward.1} parent=11 // pred_region
          _
        $region40: #{attention_forward.1} parent=11 // pred_fallthru
          _
        // Predicated region
        $region41: #{attention_forward.1} parent=11 // pred_check
          %p305 = pneg %p217
        $region42: #{attention_forward.1} parent=11 // pred_check_branch
          %307 = sbr.rel (%p305) target = $region44
        $region43: #{attention_forward.1} parent=11 // pred_region
          _
        $region44: #{attention_forward.1} parent=11 // pred_fallthru
          _
      $region12: #{attention_forward.1} parent=5 // pred_fallthru
        _
      %p308 = scmp.lt.s32.totalorder %s23, 2
      // Predicated region
      $region45: #{attention_forward.1} parent=5 // pred_check
        %p309 = pneg %p308
      $region46: #{attention_forward.1} parent=5 // pred_check_branch
        %311 = sbr.rel (%p309) target = $region48
      $region47: #{attention_forward.1} parent=5 // pred_region
        // Predicated region
        $region49: #{attention_forward.1} parent=47 // pred_check
          %p312 = pneg %p43
        $region50: #{attention_forward.1} parent=47 // pred_check_branch
          %314 = sbr.rel (%p312) target = $region52
        $region51: #{attention_forward.1} parent=47 // pred_region
          %p315 = scmp.lt.s32.totalorder %s23, 1
          %s316 = scalar_select %p315, %s23, 1
          %s317 = smul.addr %s316, 8
          %s318 = scalar_lea.vmem %s0, %s317
        $region52: #{attention_forward.1} parent=47 // pred_fallthru
          _
      $region48: #{attention_forward.1} parent=5 // pred_fallthru
        _
      %p319 = scmp.le.s32.totalorder 1, %s23
      %p320 = scmp.lt.s32.totalorder %s23, 3
      %p321 = pnand %p319, %p320
      %p322 = pneg %p321
      // Predicated region
      $region53: #{attention_forward.1} parent=5 // pred_check
        _
      $region54: #{attention_forward.1} parent=5 // pred_check_branch
        %324 = sbr.rel (%p321) target = $region56
      $region55: #{attention_forward.1} parent=5 // pred_region
        %s325 = ssub.s32 %s23, 1
        %p326 = scmp.lt.s32.totalorder %s28, 1
        %s327 = scalar_select %p326, %s28, 1
        %s328 = smul.addr %s327, 8
        %s329 = scalar_lea.vmem %s0, %s328
        %p330 = pneg %p49
        %p331 = pneg %p46
        %p332 = pneg %p70
        %p333 = pneg %p67
        %p334 = pneg %p91
        %p335 = pneg %p88
        %p336 = pneg %p112
        %p337 = pneg %p109
        %p338 = pneg %p133
        %p339 = pneg %p130
        %p340 = pneg %p154
        %p341 = pneg %p151
        %p342 = pneg %p175
        %p343 = pneg %p172
        %p344 = pneg %p196
        %p345 = pneg %p193
        %p346 = pneg %p217
        %p347 = pneg %p214
        %p348 = pneg %p243
        %p349 = pneg %p240
        %s350 = sand.u32 %s230, 1
        %s351 = scalar_lea.sflag [#allocation3], %s350
        %s352 = sand.u32 %s230, 1
        %s353 = smul.addr %s352, 8
        %s354 = scalar_lea.vmem [#allocation2], %s353
        %p355 = pneg %p269
        %p356 = pneg %p266
        %s357 = sand.u32 %s256, 1
        %s358 = scalar_lea.sflag [#allocation5], %s357
        %s359 = sand.u32 %s256, 1
        %s360 = smul.addr %s359, 32
        %s361 = scalar_lea.vmem [#allocation4], %s360
        %p362 = scmp.lt.s32.totalorder %s28, 1
        %s363 = scalar_select %p362, %s28, 1
        %s364 = smul.addr %s363, 8
        %s365 = scalar_lea.vmem %s0, %s364
        %v366 = vld [vmem:[%s365] sm:$0xff]
        %v367 = vld [vmem:[%s1] sm:$0xff]
        %v368 = vld [vmem:[%s1 + $0x8] sm:$0xff]
        %v369 = vld [vmem:[%s1 + $0x10] sm:$0xff]
        %v370 = vld [vmem:[%s1 + $0x18] sm:$0xff]
        %v371 = vld [vmem:[%s5] sm:$0x1]
        %v373 = vperm.slane %v371, 0
        %vm375 = vcmask 261120
        %v377 = vsel %vm375, %v366, 0
        %379 = vmatpush.msra.mxu0 0.0
        %380 = vmatpush.msra.mxu0 0.0
        %381 = vmatpush.msra.mxu0 0.0
        %382 = vmatpush.msra.mxu0 0.0
        %383 = vmatpush.msra.mxu0 0.0
        %384 = vmatpush.msra.mxu0 0.0
        %385 = vmatpush.msra.mxu0 0.0
        %386 = vmatpush.msra.mxu0 0.0
        %387 = vmatpush.msra.mxu0 0.0
        %388 = vmatpush.msra.mxu0 0.0
        %389 = vmatpush.msra.mxu0 0.0
        %390 = vmatpush.msra.mxu0 0.0
        %391 = vmatpush.msra.mxu0 %v370
        %392 = vmatpush.msra.mxu0 %v369
        %393 = vmatpush.msra.mxu0 %v368
        %394 = vmatpush.msra.mxu0 %v367
        %395 = vmatmul.f32.gmra.mxu0 %v377
        %v396 = vpop.f32.mrf.mxu0
        %v397 = vadd.f32 %v373, %v396
        %398 = vdwg.mxu0
        %v399 = vld [vmem:[%s2] sm:$0xff]
        %v400 = vld [vmem:[%s2 + $0x8] sm:$0xff]
        %v401 = vld [vmem:[%s2 + $0x10] sm:$0xff]
        %v402 = vld [vmem:[%s2 + $0x18] sm:$0xff]
        %v403 = vld [vmem:[%s6] sm:$0x1]
        %v405 = vperm.slane %v403, 0
        %407 = vmatpush.msra.mxu0 0.0
        %408 = vmatpush.msra.mxu0 0.0
        %409 = vmatpush.msra.mxu0 0.0
        %410 = vmatpush.msra.mxu0 0.0
        %411 = vmatpush.msra.mxu0 0.0
        %412 = vmatpush.msra.mxu0 0.0
        %413 = vmatpush.msra.mxu0 0.0
        %414 = vmatpush.msra.mxu0 0.0
        %415 = vmatpush.msra.mxu0 0.0
        %416 = vmatpush.msra.mxu0 0.0
        %417 = vmatpush.msra.mxu0 0.0
        %418 = vmatpush.msra.mxu0 0.0
        %419 = vmatpush.msra.mxu0 %v402
        %420 = vmatpush.msra.mxu0 %v401
        %421 = vmatpush.msra.mxu0 %v400
        %422 = vmatpush.msra.mxu0 %v399
        %423 = vmatmul.f32.gmra.mxu0 %v377
        %v424 = vpop.f32.mrf.mxu0
        %v425 = vadd.f32 %v405, %v424
        %426 = vdwg.mxu0
        %v427 = vld [vmem:[%s3] sm:$0xff]
        %v428 = vld [vmem:[%s3 + $0x8] sm:$0xff]
        %v429 = vld [vmem:[%s3 + $0x10] sm:$0xff]
        %v430 = vld [vmem:[%s3 + $0x18] sm:$0xff]
        %v431 = vld [vmem:[%s7] sm:$0x1]
        %v433 = vperm.slane %v431, 0
        %435 = vmatpush.msra.mxu0 0.0
        %436 = vmatpush.msra.mxu0 0.0
        %437 = vmatpush.msra.mxu0 0.0
        %438 = vmatpush.msra.mxu0 0.0
        %439 = vmatpush.msra.mxu0 0.0
        %440 = vmatpush.msra.mxu0 0.0
        %441 = vmatpush.msra.mxu0 0.0
        %442 = vmatpush.msra.mxu0 0.0
        %443 = vmatpush.msra.mxu0 0.0
        %444 = vmatpush.msra.mxu0 0.0
        %445 = vmatpush.msra.mxu0 0.0
        %446 = vmatpush.msra.mxu0 0.0
        %447 = vmatpush.msra.mxu0 %v430
        %448 = vmatpush.msra.mxu0 %v429
        %449 = vmatpush.msra.mxu0 %v428
        %450 = vmatpush.msra.mxu0 %v427
        %451 = vmatmul.f32.gmra.mxu0 %v377
        %v452 = vpop.f32.mrf.mxu0
        %v453 = vadd.f32 %v433, %v452
        %454 = vdwg.mxu0
        %vm455 = vcmask 64512
        %v457 = vsel %vm455, %v397, 0
        %v460 = vsel %vm455, %v425, 0
        %462 = vmatpush.xpose.msra.mxu0 0.0
        %463 = vmatpush.xpose.msra.mxu0 0.0
        %464 = vmatpush.xpose.msra.mxu0 0.0
        %465 = vmatpush.xpose.msra.mxu0 0.0
        %466 = vmatpush.xpose.msra.mxu0 0.0
        %467 = vmatpush.xpose.msra.mxu0 0.0
        %468 = vmatpush.xpose.msra.mxu0 0.0
        %469 = vmatpush.xpose.msra.mxu0 0.0
        %470 = vmatpush.xpose.msra.mxu0 0.0
        %471 = vmatpush.xpose.msra.mxu0 0.0
        %472 = vmatpush.xpose.msra.mxu0 0.0
        %473 = vmatpush.xpose.msra.mxu0 0.0
        %474 = vmatpush.xpose.msra.mxu0 0.0
        %475 = vmatpush.xpose.msra.mxu0 0.0
        %476 = vmatpush.xpose.msra.mxu0 0.0
        %477 = vmatpush.xpose.msra.mxu0 %v460
        %478 = vmatmul.f32.gmra.mxu0 %v457
        %v479 = vpop.f32.mrf.mxu0
        %v480 = vadd.f32 0.0, %v479
        %481 = vdwg.mxu0
        %v482 = vmul.f32 %v480, 0.35355338
        %v483 = vsel %vm455, %v482, -inf
        %484 = vmax.xlane.f32.xlu0 %v483
        %v485 = vpop.xlane.xlu0 %484
        %v486 = vsub.f32 %v482, %v485
        %v487 = vmul.f32 %v486, 1.442695
        %v488 = vpow.pop %v487
        %v489 = vsel %vm455, %v488, 0.0
        %490 = vadd.xlane.f32.xlu0 %v489
        %v491 = vpop.xlane.xlu0 %490
        %v492 = vrcp.pop %v491
        %v493 = vmul.f32 %v491, %v492
        %v494 = vsub.f32 1.0, %v493
        %v495 = vmul.f32 %v492, %v494
        %v496 = vadd.f32 %v492, %v495
        %vm497 = vweird.f32 %v491
        %vm498 = vweird.f32 %v492
        %vm499 = vmor %vm497, %vm498
        %v500 = vsel %vm499, %v492, %v496
        %v501 = vand.u32 2147483647, %v491
        %vm502 = vcmp.eq.f32.partialorder %v501, 8.507059e+37
        %v503 = vand.u32 %v491, 2147483648
        %v504 = vor.u32 1.1754944e-38, %v503
        %v505 = vsel %vm502, %v504, %v500
        %v506 = vmul.f32 %v488, %v505
        %507 = vst.msk [vmem:[%s361] sm:$0xff] %vm455, %v506
        %v509 = vsel %vm455, %v506, 0
        %511 = vmatpush.msra.mxu0 0.0
        %512 = vmatpush.msra.mxu0 0.0
        %513 = vmatpush.msra.mxu0 0.0
        %514 = vmatpush.msra.mxu0 0.0
        %515 = vmatpush.msra.mxu0 0.0
        %516 = vmatpush.msra.mxu0 0.0
        %517 = vmatpush.msra.mxu0 0.0
        %518 = vmatpush.msra.mxu0 0.0
        %519 = vmatpush.msra.mxu0 0.0
        %520 = vmatpush.msra.mxu0 0.0
        %521 = vmatpush.msra.mxu0 0.0
        %522 = vmatpush.msra.mxu0 0.0
        %523 = vmatpush.msra.mxu0 0.0
        %524 = vmatpush.msra.mxu0 0.0
        %525 = vmatpush.msra.mxu0 0.0
        %526 = vmatpush.msra.mxu0 %v453
        %527 = vmatmul.f32.gmra.mxu0 %v509
        %v528 = vpop.f32.mrf.mxu0
        %v529 = vadd.f32 0.0, %v528
        %530 = vdwg.mxu0
        %v531 = vld [vmem:[%s4] sm:$0xff]
        %s532 = scalar_lea.vmem %s1, 32
        %v533 = vld [vmem:[%s532] sm:$0xff]
        %v534 = vld [vmem:[%s532 + $0x8] sm:$0xff]
        %v535 = vld [vmem:[%s532 + $0x10] sm:$0xff]
        %v536 = vld [vmem:[%s532 + $0x18] sm:$0xff]
        %s537 = scalar_lea.vmem %s5, 1
        %v538 = vld [vmem:[%s537] sm:$0x1]
        %v540 = vperm.slane %v538, 0
        %542 = vmatpush.msra.mxu0 0.0
        %543 = vmatpush.msra.mxu0 0.0
        %544 = vmatpush.msra.mxu0 0.0
        %545 = vmatpush.msra.mxu0 0.0
        %546 = vmatpush.msra.mxu0 0.0
        %547 = vmatpush.msra.mxu0 0.0
        %548 = vmatpush.msra.mxu0 0.0
        %549 = vmatpush.msra.mxu0 0.0
        %550 = vmatpush.msra.mxu0 0.0
        %551 = vmatpush.msra.mxu0 0.0
        %552 = vmatpush.msra.mxu0 0.0
        %553 = vmatpush.msra.mxu0 0.0
        %554 = vmatpush.msra.mxu0 %v536
        %555 = vmatpush.msra.mxu0 %v535
        %556 = vmatpush.msra.mxu0 %v534
        %557 = vmatpush.msra.mxu0 %v533
        %558 = vmatmul.f32.gmra.mxu0 %v377
        %v559 = vpop.f32.mrf.mxu0
        %v560 = vadd.f32 %v540, %v559
        %561 = vdwg.mxu0
        %s562 = scalar_lea.vmem %s2, 32
        %v563 = vld [vmem:[%s562] sm:$0xff]
        %v564 = vld [vmem:[%s562 + $0x8] sm:$0xff]
        %v565 = vld [vmem:[%s562 + $0x10] sm:$0xff]
        %v566 = vld [vmem:[%s562 + $0x18] sm:$0xff]
        %s567 = scalar_lea.vmem %s6, 1
        %v568 = vld [vmem:[%s567] sm:$0x1]
        %v570 = vperm.slane %v568, 0
        %572 = vmatpush.msra.mxu0 0.0
        %573 = vmatpush.msra.mxu0 0.0
        %574 = vmatpush.msra.mxu0 0.0
        %575 = vmatpush.msra.mxu0 0.0
        %576 = vmatpush.msra.mxu0 0.0
        %577 = vmatpush.msra.mxu0 0.0
        %578 = vmatpush.msra.mxu0 0.0
        %579 = vmatpush.msra.mxu0 0.0
        %580 = vmatpush.msra.mxu0 0.0
        %581 = vmatpush.msra.mxu0 0.0
        %582 = vmatpush.msra.mxu0 0.0
        %583 = vmatpush.msra.mxu0 0.0
        %584 = vmatpush.msra.mxu0 %v566
        %585 = vmatpush.msra.mxu0 %v565
        %586 = vmatpush.msra.mxu0 %v564
        %587 = vmatpush.msra.mxu0 %v563
        %588 = vmatmul.f32.gmra.mxu0 %v377
        %v589 = vpop.f32.mrf.mxu0
        %v590 = vadd.f32 %v570, %v589
        %591 = vdwg.mxu0
        %s592 = scalar_lea.vmem %s3, 32
        %v593 = vld [vmem:[%s592] sm:$0xff]
        %v594 = vld [vmem:[%s592 + $0x8] sm:$0xff]
        %v595 = vld [vmem:[%s592 + $0x10] sm:$0xff]
        %v596 = vld [vmem:[%s592 + $0x18] sm:$0xff]
        %s597 = scalar_lea.vmem %s7, 1
        %v598 = vld [vmem:[%s597] sm:$0x1]
        %v600 = vperm.slane %v598, 0
        %602 = vmatpush.msra.mxu0 0.0
        %603 = vmatpush.msra.mxu0 0.0
        %604 = vmatpush.msra.mxu0 0.0
        %605 = vmatpush.msra.mxu0 0.0
        %606 = vmatpush.msra.mxu0 0.0
        %607 = vmatpush.msra.mxu0 0.0
        %608 = vmatpush.msra.mxu0 0.0
        %609 = vmatpush.msra.mxu0 0.0
        %610 = vmatpush.msra.mxu0 0.0
        %611 = vmatpush.msra.mxu0 0.0
        %612 = vmatpush.msra.mxu0 0.0
        %613 = vmatpush.msra.mxu0 0.0
        %614 = vmatpush.msra.mxu0 %v596
        %615 = vmatpush.msra.mxu0 %v595
        %616 = vmatpush.msra.mxu0 %v594
        %617 = vmatpush.msra.mxu0 %v593
        %618 = vmatmul.f32.gmra.mxu0 %v377
        %v619 = vpop.f32.mrf.mxu0
        %v620 = vadd.f32 %v600, %v619
        %621 = vdwg.mxu0
        %v623 = vsel %vm455, %v560, 0
        %v626 = vsel %vm455, %v590, 0
        %628 = vmatpush.xpose.msra.mxu0 0.0
        %629 = vmatpush.xpose.msra.mxu0 0.0
        %630 = vmatpush.xpose.msra.mxu0 0.0
        %631 = vmatpush.xpose.msra.mxu0 0.0
        %632 = vmatpush.xpose.msra.mxu0 0.0
        %633 = vmatpush.xpose.msra.mxu0 0.0
        %634 = vmatpush.xpose.msra.mxu0 0.0
        %635 = vmatpush.xpose.msra.mxu0 0.0
        %636 = vmatpush.xpose.msra.mxu0 0.0
        %637 = vmatpush.xpose.msra.mxu0 0.0
        %638 = vmatpush.xpose.msra.mxu0 0.0
        %639 = vmatpush.xpose.msra.mxu0 0.0
        %640 = vmatpush.xpose.msra.mxu0 0.0
        %641 = vmatpush.xpose.msra.mxu0 0.0
        %642 = vmatpush.xpose.msra.mxu0 0.0
        %643 = vmatpush.xpose.msra.mxu0 %v626
        %644 = vmatmul.f32.gmra.mxu0 %v623
        %v645 = vpop.f32.mrf.mxu0
        %v646 = vadd.f32 0.0, %v645
        %647 = vdwg.mxu0
        %v648 = vmul.f32 %v646, 0.35355338
        %v649 = vsel %vm455, %v648, -inf
        %650 = vmax.xlane.f32.xlu0 %v649
        %v651 = vpop.xlane.xlu0 %650
        %v652 = vsub.f32 %v648, %v651
        %v653 = vmul.f32 %v652, 1.442695
        %v654 = vpow.pop %v653
        %v655 = vsel %vm455, %v654, 0.0
        %656 = vadd.xlane.f32.xlu0 %v655
        %v657 = vpop.xlane.xlu0 %656
        %v658 = vrcp.pop %v657
        %v659 = vmul.f32 %v657, %v658
        %v660 = vsub.f32 1.0, %v659
        %v661 = vmul.f32 %v658, %v660
        %v662 = vadd.f32 %v658, %v661
        %vm663 = vweird.f32 %v657
        %vm664 = vweird.f32 %v658
        %vm665 = vmor %vm663, %vm664
        %v666 = vsel %vm665, %v658, %v662
        %v667 = vand.u32 2147483647, %v657
        %vm668 = vcmp.eq.f32.partialorder %v667, 8.507059e+37
        %v669 = vand.u32 %v657, 2147483648
        %v670 = vor.u32 1.1754944e-38, %v669
        %v671 = vsel %vm668, %v670, %v666
        %v672 = vmul.f32 %v654, %v671
        %s673 = scalar_lea.vmem %s361, 8 [#allocation4]
        %674 = vst.msk [vmem:[%s673] sm:$0xff] %vm455, %v672
        %v676 = vsel %vm455, %v672, 0
        %678 = vmatpush.msra.mxu0 0.0
        %679 = vmatpush.msra.mxu0 0.0
        %680 = vmatpush.msra.mxu0 0.0
        %681 = vmatpush.msra.mxu0 0.0
        %682 = vmatpush.msra.mxu0 0.0
        %683 = vmatpush.msra.mxu0 0.0
        %684 = vmatpush.msra.mxu0 0.0
        %685 = vmatpush.msra.mxu0 0.0
        %686 = vmatpush.msra.mxu0 0.0
        %687 = vmatpush.msra.mxu0 0.0
        %688 = vmatpush.msra.mxu0 0.0
        %689 = vmatpush.msra.mxu0 0.0
        %690 = vmatpush.msra.mxu0 0.0
        %691 = vmatpush.msra.mxu0 0.0
        %692 = vmatpush.msra.mxu0 0.0
        %693 = vmatpush.msra.mxu0 %v620
        %694 = vmatmul.f32.gmra.mxu0 %v676
        %v695 = vpop.f32.mrf.mxu0
        %v696 = vadd.f32 0.0, %v695
        %697 = vdwg.mxu0
        %s698 = scalar_lea.vmem %s4, 8
        %v699 = vld [vmem:[%s698] sm:$0xff]
        %v701 = vsel %vm455, %v696, 0
        %703 = vmatpush.msra.mxu0 0.0
        %704 = vmatpush.msra.mxu0 0.0
        %705 = vmatpush.msra.mxu0 0.0
        %706 = vmatpush.msra.mxu0 0.0
        %707 = vmatpush.msra.mxu0 0.0
        %708 = vmatpush.msra.mxu0 0.0
        %709 = vmatpush.msra.mxu0 0.0
        %710 = vmatpush.msra.mxu0 0.0
        %711 = vmatpush.msra.mxu0 0.0
        %712 = vmatpush.msra.mxu0 0.0
        %713 = vmatpush.msra.mxu0 0.0
        %714 = vmatpush.msra.mxu0 0.0
        %715 = vmatpush.msra.mxu0 0.0
        %716 = vmatpush.msra.mxu0 0.0
        %717 = vmatpush.msra.mxu0 0.0
        %718 = vmatpush.msra.mxu0 %v699
        %719 = vmatmul.f32.gmra.mxu0 %v701
        %v720 = vpop.f32.mrf.mxu0
        %v721 = vadd.f32 0.0, %v720
        %722 = vdwg.mxu0
        %v724 = vsel %vm455, %v529, 0
        %726 = vmatpush.msra.mxu0 0.0
        %727 = vmatpush.msra.mxu0 0.0
        %728 = vmatpush.msra.mxu0 0.0
        %729 = vmatpush.msra.mxu0 0.0
        %730 = vmatpush.msra.mxu0 0.0
        %731 = vmatpush.msra.mxu0 0.0
        %732 = vmatpush.msra.mxu0 0.0
        %733 = vmatpush.msra.mxu0 0.0
        %734 = vmatpush.msra.mxu0 0.0
        %735 = vmatpush.msra.mxu0 0.0
        %736 = vmatpush.msra.mxu0 0.0
        %737 = vmatpush.msra.mxu0 0.0
        %738 = vmatpush.msra.mxu0 0.0
        %739 = vmatpush.msra.mxu0 0.0
        %740 = vmatpush.msra.mxu0 0.0
        %741 = vmatpush.msra.mxu0 %v531
        %742 = vmatmul.f32.gmra.mxu0 %v724
        %v743 = vpop.f32.mrf.mxu0
        %v744 = vadd.f32 %v721, %v743
        %745 = vdwg.mxu0
        %s746 = scalar_lea.vmem %s1, 64
        %v747 = vld [vmem:[%s746] sm:$0xff]
        %v748 = vld [vmem:[%s746 + $0x8] sm:$0xff]
        %v749 = vld [vmem:[%s746 + $0x10] sm:$0xff]
        %v750 = vld [vmem:[%s746 + $0x18] sm:$0xff]
        %s751 = scalar_lea.vmem %s5, 2
        %v752 = vld [vmem:[%s751] sm:$0x1]
        %v754 = vperm.slane %v752, 0
        %756 = vmatpush.msra.mxu0 0.0
        %757 = vmatpush.msra.mxu0 0.0
        %758 = vmatpush.msra.mxu0 0.0
        %759 = vmatpush.msra.mxu0 0.0
        %760 = vmatpush.msra.mxu0 0.0
        %761 = vmatpush.msra.mxu0 0.0
        %762 = vmatpush.msra.mxu0 0.0
        %763 = vmatpush.msra.mxu0 0.0
        %764 = vmatpush.msra.mxu0 0.0
        %765 = vmatpush.msra.mxu0 0.0
        %766 = vmatpush.msra.mxu0 0.0
        %767 = vmatpush.msra.mxu0 0.0
        %768 = vmatpush.msra.mxu0 %v750
        %769 = vmatpush.msra.mxu0 %v749
        %770 = vmatpush.msra.mxu0 %v748
        %771 = vmatpush.msra.mxu0 %v747
        %772 = vmatmul.f32.gmra.mxu0 %v377
        %v773 = vpop.f32.mrf.mxu0
        %v774 = vadd.f32 %v754, %v773
        %775 = vdwg.mxu0
        %s776 = scalar_lea.vmem %s2, 64
        %v777 = vld [vmem:[%s776] sm:$0xff]
        %v778 = vld [vmem:[%s776 + $0x8] sm:$0xff]
        %v779 = vld [vmem:[%s776 + $0x10] sm:$0xff]
        %v780 = vld [vmem:[%s776 + $0x18] sm:$0xff]
        %s781 = scalar_lea.vmem %s6, 2
        %v782 = vld [vmem:[%s781] sm:$0x1]
        %v784 = vperm.slane %v782, 0
        %786 = vmatpush.msra.mxu0 0.0
        %787 = vmatpush.msra.mxu0 0.0
        %788 = vmatpush.msra.mxu0 0.0
        %789 = vmatpush.msra.mxu0 0.0
        %790 = vmatpush.msra.mxu0 0.0
        %791 = vmatpush.msra.mxu0 0.0
        %792 = vmatpush.msra.mxu0 0.0
        %793 = vmatpush.msra.mxu0 0.0
        %794 = vmatpush.msra.mxu0 0.0
        %795 = vmatpush.msra.mxu0 0.0
        %796 = vmatpush.msra.mxu0 0.0
        %797 = vmatpush.msra.mxu0 0.0
        %798 = vmatpush.msra.mxu0 %v780
        %799 = vmatpush.msra.mxu0 %v779
        %800 = vmatpush.msra.mxu0 %v778
        %801 = vmatpush.msra.mxu0 %v777
        %802 = vmatmul.f32.gmra.mxu0 %v377
        %v803 = vpop.f32.mrf.mxu0
        %v804 = vadd.f32 %v784, %v803
        %805 = vdwg.mxu0
        %s806 = scalar_lea.vmem %s3, 64
        %v807 = vld [vmem:[%s806] sm:$0xff]
        %v808 = vld [vmem:[%s806 + $0x8] sm:$0xff]
        %v809 = vld [vmem:[%s806 + $0x10] sm:$0xff]
        %v810 = vld [vmem:[%s806 + $0x18] sm:$0xff]
        %s811 = scalar_lea.vmem %s7, 2
        %v812 = vld [vmem:[%s811] sm:$0x1]
        %v814 = vperm.slane %v812, 0
        %816 = vmatpush.msra.mxu0 0.0
        %817 = vmatpush.msra.mxu0 0.0
        %818 = vmatpush.msra.mxu0 0.0
        %819 = vmatpush.msra.mxu0 0.0
        %820 = vmatpush.msra.mxu0 0.0
        %821 = vmatpush.msra.mxu0 0.0
        %822 = vmatpush.msra.mxu0 0.0
        %823 = vmatpush.msra.mxu0 0.0
        %824 = vmatpush.msra.mxu0 0.0
        %825 = vmatpush.msra.mxu0 0.0
        %826 = vmatpush.msra.mxu0 0.0
        %827 = vmatpush.msra.mxu0 0.0
        %828 = vmatpush.msra.mxu0 %v810
        %829 = vmatpush.msra.mxu0 %v809
        %830 = vmatpush.msra.mxu0 %v808
        %831 = vmatpush.msra.mxu0 %v807
        %832 = vmatmul.f32.gmra.mxu0 %v377
        %v833 = vpop.f32.mrf.mxu0
        %v834 = vadd.f32 %v814, %v833
        %835 = vdwg.mxu0
        %v837 = vsel %vm455, %v774, 0
        %v840 = vsel %vm455, %v804, 0
        %842 = vmatpush.xpose.msra.mxu0 0.0
        %843 = vmatpush.xpose.msra.mxu0 0.0
        %844 = vmatpush.xpose.msra.mxu0 0.0
        %845 = vmatpush.xpose.msra.mxu0 0.0
        %846 = vmatpush.xpose.msra.mxu0 0.0
        %847 = vmatpush.xpose.msra.mxu0 0.0
        %848 = vmatpush.xpose.msra.mxu0 0.0
        %849 = vmatpush.xpose.msra.mxu0 0.0
        %850 = vmatpush.xpose.msra.mxu0 0.0
        %851 = vmatpush.xpose.msra.mxu0 0.0
        %852 = vmatpush.xpose.msra.mxu0 0.0
        %853 = vmatpush.xpose.msra.mxu0 0.0
        %854 = vmatpush.xpose.msra.mxu0 0.0
        %855 = vmatpush.xpose.msra.mxu0 0.0
        %856 = vmatpush.xpose.msra.mxu0 0.0
        %857 = vmatpush.xpose.msra.mxu0 %v840
        %858 = vmatmul.f32.gmra.mxu0 %v837
        %v859 = vpop.f32.mrf.mxu0
        %v860 = vadd.f32 0.0, %v859
        %861 = vdwg.mxu0
        %v862 = vmul.f32 %v860, 0.35355338
        %v863 = vsel %vm455, %v862, -inf
        %864 = vmax.xlane.f32.xlu0 %v863
        %v865 = vpop.xlane.xlu0 %864
        %v866 = vsub.f32 %v862, %v865
        %v867 = vmul.f32 %v866, 1.442695
        %v868 = vpow.pop %v867
        %v869 = vsel %vm455, %v868, 0.0
        %870 = vadd.xlane.f32.xlu0 %v869
        %v871 = vpop.xlane.xlu0 %870
        %v872 = vrcp.pop %v871
        %v873 = vmul.f32 %v871, %v872
        %v874 = vsub.f32 1.0, %v873
        %v875 = vmul.f32 %v872, %v874
        %v876 = vadd.f32 %v872, %v875
        %vm877 = vweird.f32 %v871
        %vm878 = vweird.f32 %v872
        %vm879 = vmor %vm877, %vm878
        %v880 = vsel %vm879, %v872, %v876
        %v881 = vand.u32 2147483647, %v871
        %vm882 = vcmp.eq.f32.partialorder %v881, 8.507059e+37
        %v883 = vand.u32 %v871, 2147483648
        %v884 = vor.u32 1.1754944e-38, %v883
        %v885 = vsel %vm882, %v884, %v880
        %v886 = vmul.f32 %v868, %v885
        %s887 = scalar_lea.vmem %s361, 16 [#allocation4]
        %888 = vst.msk [vmem:[%s887] sm:$0xff] %vm455, %v886
        %v890 = vsel %vm455, %v886, 0
        %892 = vmatpush.msra.mxu0 0.0
        %893 = vmatpush.msra.mxu0 0.0
        %894 = vmatpush.msra.mxu0 0.0
        %895 = vmatpush.msra.mxu0 0.0
        %896 = vmatpush.msra.mxu0 0.0
        %897 = vmatpush.msra.mxu0 0.0
        %898 = vmatpush.msra.mxu0 0.0
        %899 = vmatpush.msra.mxu0 0.0
        %900 = vmatpush.msra.mxu0 0.0
        %901 = vmatpush.msra.mxu0 0.0
        %902 = vmatpush.msra.mxu0 0.0
        %903 = vmatpush.msra.mxu0 0.0
        %904 = vmatpush.msra.mxu0 0.0
        %905 = vmatpush.msra.mxu0 0.0
        %906 = vmatpush.msra.mxu0 0.0
        %907 = vmatpush.msra.mxu0 %v834
        %908 = vmatmul.f32.gmra.mxu0 %v890
        %v909 = vpop.f32.mrf.mxu0
        %v910 = vadd.f32 0.0, %v909
        %911 = vdwg.mxu0
        %s912 = scalar_lea.vmem %s4, 16
        %v913 = vld [vmem:[%s912] sm:$0xff]
        %v915 = vsel %vm455, %v910, 0
        %917 = vmatpush.msra.mxu0 0.0
        %918 = vmatpush.msra.mxu0 0.0
        %919 = vmatpush.msra.mxu0 0.0
        %920 = vmatpush.msra.mxu0 0.0
        %921 = vmatpush.msra.mxu0 0.0
        %922 = vmatpush.msra.mxu0 0.0
        %923 = vmatpush.msra.mxu0 0.0
        %924 = vmatpush.msra.mxu0 0.0
        %925 = vmatpush.msra.mxu0 0.0
        %926 = vmatpush.msra.mxu0 0.0
        %927 = vmatpush.msra.mxu0 0.0
        %928 = vmatpush.msra.mxu0 0.0
        %929 = vmatpush.msra.mxu0 0.0
        %930 = vmatpush.msra.mxu0 0.0
        %931 = vmatpush.msra.mxu0 0.0
        %932 = vmatpush.msra.mxu0 %v913
        %933 = vmatmul.f32.gmra.mxu0 %v915
        %v934 = vpop.f32.mrf.mxu0
        %v935 = vadd.f32 0.0, %v934
        %936 = vdwg.mxu0
        %v937 = vadd.f32 %v744, %v935
        %s938 = scalar_lea.vmem %s1, 96
        %v939 = vld [vmem:[%s938] sm:$0xff]
        %v940 = vld [vmem:[%s938 + $0x8] sm:$0xff]
        %v941 = vld [vmem:[%s938 + $0x10] sm:$0xff]
        %v942 = vld [vmem:[%s938 + $0x18] sm:$0xff]
        %s943 = scalar_lea.vmem %s5, 3
        %v944 = vld [vmem:[%s943] sm:$0x1]
        %v946 = vperm.slane %v944, 0
        %948 = vmatpush.msra.mxu0 0.0
        %949 = vmatpush.msra.mxu0 0.0
        %950 = vmatpush.msra.mxu0 0.0
        %951 = vmatpush.msra.mxu0 0.0
        %952 = vmatpush.msra.mxu0 0.0
        %953 = vmatpush.msra.mxu0 0.0
        %954 = vmatpush.msra.mxu0 0.0
        %955 = vmatpush.msra.mxu0 0.0
        %956 = vmatpush.msra.mxu0 0.0
        %957 = vmatpush.msra.mxu0 0.0
        %958 = vmatpush.msra.mxu0 0.0
        %959 = vmatpush.msra.mxu0 0.0
        %960 = vmatpush.msra.mxu0 %v942
        %961 = vmatpush.msra.mxu0 %v941
        %962 = vmatpush.msra.mxu0 %v940
        %963 = vmatpush.msra.mxu0 %v939
        %964 = vmatmul.f32.gmra.mxu0 %v377
        %v965 = vpop.f32.mrf.mxu0
        %v966 = vadd.f32 %v946, %v965
        %967 = vdwg.mxu0
        %s968 = scalar_lea.vmem %s2, 96
        %v969 = vld [vmem:[%s968] sm:$0xff]
        %v970 = vld [vmem:[%s968 + $0x8] sm:$0xff]
        %v971 = vld [vmem:[%s968 + $0x10] sm:$0xff]
        %v972 = vld [vmem:[%s968 + $0x18] sm:$0xff]
        %s973 = scalar_lea.vmem %s6, 3
        %v974 = vld [vmem:[%s973] sm:$0x1]
        %v976 = vperm.slane %v974, 0
        %978 = vmatpush.msra.mxu0 0.0
        %979 = vmatpush.msra.mxu0 0.0
        %980 = vmatpush.msra.mxu0 0.0
        %981 = vmatpush.msra.mxu0 0.0
        %982 = vmatpush.msra.mxu0 0.0
        %983 = vmatpush.msra.mxu0 0.0
        %984 = vmatpush.msra.mxu0 0.0
        %985 = vmatpush.msra.mxu0 0.0
        %986 = vmatpush.msra.mxu0 0.0
        %987 = vmatpush.msra.mxu0 0.0
        %988 = vmatpush.msra.mxu0 0.0
        %989 = vmatpush.msra.mxu0 0.0
        %990 = vmatpush.msra.mxu0 %v972
        %991 = vmatpush.msra.mxu0 %v971
        %992 = vmatpush.msra.mxu0 %v970
        %993 = vmatpush.msra.mxu0 %v969
        %994 = vmatmul.f32.gmra.mxu0 %v377
        %v995 = vpop.f32.mrf.mxu0
        %v996 = vadd.f32 %v976, %v995
        %997 = vdwg.mxu0
        %s998 = scalar_lea.vmem %s3, 96
        %v999 = vld [vmem:[%s998] sm:$0xff]
        %v1000 = vld [vmem:[%s998 + $0x8] sm:$0xff]
        %v1001 = vld [vmem:[%s998 + $0x10] sm:$0xff]
        %v1002 = vld [vmem:[%s998 + $0x18] sm:$0xff]
        %s1003 = scalar_lea.vmem %s7, 3
        %v1004 = vld [vmem:[%s1003] sm:$0x1]
        %v1006 = vperm.slane %v1004, 0
        %1008 = vmatpush.msra.mxu0 0.0
        %1009 = vmatpush.msra.mxu0 0.0
        %1010 = vmatpush.msra.mxu0 0.0
        %1011 = vmatpush.msra.mxu0 0.0
        %1012 = vmatpush.msra.mxu0 0.0
        %1013 = vmatpush.msra.mxu0 0.0
        %1014 = vmatpush.msra.mxu0 0.0
        %1015 = vmatpush.msra.mxu0 0.0
        %1016 = vmatpush.msra.mxu0 0.0
        %1017 = vmatpush.msra.mxu0 0.0
        %1018 = vmatpush.msra.mxu0 0.0
        %1019 = vmatpush.msra.mxu0 0.0
        %1020 = vmatpush.msra.mxu0 %v1002
        %1021 = vmatpush.msra.mxu0 %v1001
        %1022 = vmatpush.msra.mxu0 %v1000
        %1023 = vmatpush.msra.mxu0 %v999
        %1024 = vmatmul.f32.gmra.mxu0 %v377
        %v1025 = vpop.f32.mrf.mxu0
        %v1026 = vadd.f32 %v1006, %v1025
        %1027 = vdwg.mxu0
        %v1029 = vsel %vm455, %v966, 0
        %v1032 = vsel %vm455, %v996, 0
        %1034 = vmatpush.xpose.msra.mxu0 0.0
        %1035 = vmatpush.xpose.msra.mxu0 0.0
        %1036 = vmatpush.xpose.msra.mxu0 0.0
        %1037 = vmatpush.xpose.msra.mxu0 0.0
        %1038 = vmatpush.xpose.msra.mxu0 0.0
        %1039 = vmatpush.xpose.msra.mxu0 0.0
        %1040 = vmatpush.xpose.msra.mxu0 0.0
        %1041 = vmatpush.xpose.msra.mxu0 0.0
        %1042 = vmatpush.xpose.msra.mxu0 0.0
        %1043 = vmatpush.xpose.msra.mxu0 0.0
        %1044 = vmatpush.xpose.msra.mxu0 0.0
        %1045 = vmatpush.xpose.msra.mxu0 0.0
        %1046 = vmatpush.xpose.msra.mxu0 0.0
        %1047 = vmatpush.xpose.msra.mxu0 0.0
        %1048 = vmatpush.xpose.msra.mxu0 0.0
        %1049 = vmatpush.xpose.msra.mxu0 %v1032
        %1050 = vmatmul.f32.gmra.mxu0 %v1029
        %v1051 = vpop.f32.mrf.mxu0
        %v1052 = vadd.f32 0.0, %v1051
        %1053 = vdwg.mxu0
        %v1054 = vmul.f32 %v1052, 0.35355338
        %v1055 = vsel %vm455, %v1054, -inf
        %1056 = vmax.xlane.f32.xlu0 %v1055
        %v1057 = vpop.xlane.xlu0 %1056
        %v1058 = vsub.f32 %v1054, %v1057
        %v1059 = vmul.f32 %v1058, 1.442695
        %v1060 = vpow.pop %v1059
        %v1061 = vsel %vm455, %v1060, 0.0
        %1062 = vadd.xlane.f32.xlu0 %v1061
        %v1063 = vpop.xlane.xlu0 %1062
        %v1064 = vrcp.pop %v1063
        %v1065 = vmul.f32 %v1063, %v1064
        %v1066 = vsub.f32 1.0, %v1065
        %v1067 = vmul.f32 %v1064, %v1066
        %v1068 = vadd.f32 %v1064, %v1067
        %vm1069 = vweird.f32 %v1063
        %vm1070 = vweird.f32 %v1064
        %vm1071 = vmor %vm1069, %vm1070
        %v1072 = vsel %vm1071, %v1064, %v1068
        %v1073 = vand.u32 2147483647, %v1063
        %vm1074 = vcmp.eq.f32.partialorder %v1073, 8.507059e+37
        %v1075 = vand.u32 %v1063, 2147483648
        %v1076 = vor.u32 1.1754944e-38, %v1075
        %v1077 = vsel %vm1074, %v1076, %v1072
        %v1078 = vmul.f32 %v1060, %v1077
        %s1079 = scalar_lea.vmem %s361, 24 [#allocation4]
        %1080 = vst.msk [vmem:[%s1079] sm:$0xff] %vm455, %v1078
        %v1082 = vsel %vm455, %v1078, 0
        %1084 = vmatpush.msra.mxu0 0.0
        %1085 = vmatpush.msra.mxu0 0.0
        %1086 = vmatpush.msra.mxu0 0.0
        %1087 = vmatpush.msra.mxu0 0.0
        %1088 = vmatpush.msra.mxu0 0.0
        %1089 = vmatpush.msra.mxu0 0.0
        %1090 = vmatpush.msra.mxu0 0.0
        %1091 = vmatpush.msra.mxu0 0.0
        %1092 = vmatpush.msra.mxu0 0.0
        %1093 = vmatpush.msra.mxu0 0.0
        %1094 = vmatpush.msra.mxu0 0.0
        %1095 = vmatpush.msra.mxu0 0.0
        %1096 = vmatpush.msra.mxu0 0.0
        %1097 = vmatpush.msra.mxu0 0.0
        %1098 = vmatpush.msra.mxu0 0.0
        %1099 = vmatpush.msra.mxu0 %v1026
        %1100 = vmatmul.f32.gmra.mxu0 %v1082
        %v1101 = vpop.f32.mrf.mxu0
        %v1102 = vadd.f32 0.0, %v1101
        %1103 = vdwg.mxu0
        %s1104 = scalar_lea.vmem %s4, 24
        %v1105 = vld [vmem:[%s1104] sm:$0xff]
        %v1107 = vsel %vm455, %v1102, 0
        %1109 = vmatpush.msra.mxu0 0.0
        %1110 = vmatpush.msra.mxu0 0.0
        %1111 = vmatpush.msra.mxu0 0.0
        %1112 = vmatpush.msra.mxu0 0.0
        %1113 = vmatpush.msra.mxu0 0.0
        %1114 = vmatpush.msra.mxu0 0.0
        %1115 = vmatpush.msra.mxu0 0.0
        %1116 = vmatpush.msra.mxu0 0.0
        %1117 = vmatpush.msra.mxu0 0.0
        %1118 = vmatpush.msra.mxu0 0.0
        %1119 = vmatpush.msra.mxu0 0.0
        %1120 = vmatpush.msra.mxu0 0.0
        %1121 = vmatpush.msra.mxu0 0.0
        %1122 = vmatpush.msra.mxu0 0.0
        %1123 = vmatpush.msra.mxu0 0.0
        %1124 = vmatpush.msra.mxu0 %v1105
        %1125 = vmatmul.f32.gmra.mxu0 %v1107
        %v1126 = vpop.f32.mrf.mxu0
        %v1127 = vadd.f32 0.0, %v1126
        %1128 = vdwg.mxu0
        %v1129 = vadd.f32 %v937, %v1127
        %v1130 = vld [vmem:[%s8] sm:$0x1]
        %v1132 = vperm.slane %v1130, 0
        %v1134 = vadd.f32 %v1129, %v1132
        %1135 = vst.msk [vmem:[%s354] sm:$0xff] %vm375, %v1134
        %s1136 = sand.u32 %s230, 1
        %s1137 = scalar_lea.sflag [#allocation3], %s1136
        %s1138 = sand.u32 %s230, 1
        %s1139 = smul.addr %s1138, 8
        %s1140 = scalar_lea.vmem [#allocation2], %s1139
        %s1141 = sand.u32 %s256, 1
        %s1142 = scalar_lea.sflag [#allocation5], %s1141
        %s1143 = sand.u32 %s256, 1
        %s1144 = smul.addr %s1143, 32
        %s1145 = scalar_lea.vmem [#allocation4], %s1144
        // Predicated region
        $region57: #{attention_forward.1} parent=55 // pred_check
          %p1146 = pneg %p240
        $region58: #{attention_forward.1} parent=55 // pred_check_branch
          %1148 = sbr.rel (%p1146) target = $region60
        $region59: #{attention_forward.1} parent=55 // pred_region
          %1150 = vsyncadd %s1137, 0
          %s1151 = smul.addr %s28, 8
          %s1152 = scalar_lea.hbm %s9, %s1151
          %s1154 = sshll.u32 %s1140, 4
          %s1155 = int_to_ptr.vmem [resolvable:$true] %s1154
          %s1156 = sshll.u32 %s1152, 4
          %s1157 = int_to_ptr.hbm [resolvable:$true] %s1156
          %1159 = dma.vmem_to_hbm [thread:$0]  %s1155, 128, %s1157, %s1137
        $region60: #{attention_forward.1} parent=55 // pred_fallthru
          _
        // Predicated region
        $region61: #{attention_forward.1} parent=55 // pred_check
          %p1160 = pneg %p266
        $region62: #{attention_forward.1} parent=55 // pred_check_branch
          %1162 = sbr.rel (%p1160) target = $region64
        $region63: #{attention_forward.1} parent=55 // pred_region
          %1164 = vsyncadd %s1142, 0
          %s1165 = smul.addr %s28, 4
          %s1166 = smul.addr %s1165, 8
          %s1167 = scalar_lea.hbm %s10, %s1166
          %s1168 = sshll.u32 %s1145, 4
          %s1169 = int_to_ptr.vmem [resolvable:$true] %s1168
          %s1170 = sshll.u32 %s1167, 4
          %s1171 = int_to_ptr.hbm [resolvable:$true] %s1170
          %1176 = dma.vmem_to_hbm [thread:$0]  %s1169, 512, %s1171, %s1142, 128, 128, 8
        $region64: #{attention_forward.1} parent=55 // pred_fallthru
          _
      $region56: #{attention_forward.1} parent=5 // pred_fallthru
        _
      %p1177 = scmp.le.s32.totalorder 2, %s23
      // Predicated region
      $region65: #{attention_forward.1} parent=5 // pred_check
        %p1178 = pneg %p1177
      $region66: #{attention_forward.1} parent=5 // pred_check_branch
        %1180 = sbr.rel (%p1178) target = $region68
      $region67: #{attention_forward.1} parent=5 // pred_region
        %s1181 = ssub.s32 %s23, 2
        // Predicated region
        $region69: #{attention_forward.1} parent=67 // pred_check
          %p1182 = pneg %p246
        $region70: #{attention_forward.1} parent=67 // pred_check_branch
          %1184 = sbr.rel (%p1182) target = $region72
        $region71: #{attention_forward.1} parent=67 // pred_region
          %s1185 = sand.u32 %s231, 1
          %s1186 = scalar_lea.sflag [#allocation3], %s1185
          %s1187 = sand.u32 %s231, 1
          %s1188 = smul.addr %s1187, 8
          %s1189 = scalar_lea.vmem [#allocation2], %s1188
          %1191 = dma.done %s1186, 128
        $region72: #{attention_forward.1} parent=67 // pred_fallthru
          _
        // Predicated region
        $region73: #{attention_forward.1} parent=67 // pred_check
          %p1192 = pneg %p272
        $region74: #{attention_forward.1} parent=67 // pred_check_branch
          %1194 = sbr.rel (%p1192) target = $region76
        $region75: #{attention_forward.1} parent=67 // pred_region
          %s1195 = sand.u32 %s257, 1
          %s1196 = scalar_lea.sflag [#allocation5], %s1195
          %s1197 = sand.u32 %s257, 1
          %s1198 = smul.addr %s1197, 32
          %s1199 = scalar_lea.vmem [#allocation4], %s1198
          %1201 = dma.done %s1196, 512
        $region76: #{attention_forward.1} parent=67 // pred_fallthru
          _
      $region68: #{attention_forward.1} parent=5 // pred_fallthru
        _
    $region6: #{attention_forward.1} parent=1 // loop_footer
      %s27 = sadd.s32 1, %s23
    $region7: #{attention_forward.1} parent=1 // loop_footer_branch
      %22 = sbr.rel target = $region3
    $region8: #{attention_forward.1} parent=1 // loop_exit
      _
    %1202 = vsyncpa [#allocation3], 1
    %s1203 = scalar_lea.sflag [#allocation3], 1
    %1204 = vsyncpa %s1203, 1
    %1205 = vsyncpa [#allocation5], 1
    %s1206 = scalar_lea.sflag [#allocation5], 1
    %1207 = vsyncpa %s1206, 1

</llo_original>
